<compile_context>
chip_gen: v5e
topology: v5e:2x2
jax: 0.10.0
libtpu: 0.0.40
codegen_flags: <defaults>
</compile_context>

<pallas_src>
import functools

import jax
import jax.numpy as jnp
from jax.experimental import pallas as pl
from jax.experimental.pallas import tpu as pltpu

LANE = 128


def _round_up(x, m):
    return (x + m - 1) // m * m


def _pad_w(w, k_pad=None, n_pad=None):
    """Zero-pad a weight matrix to (k_pad, n_pad) and cast to bf16 (once, at init)."""
    K, N = w.shape
    k_pad = K if k_pad is None else k_pad
    n_pad = N if n_pad is None else n_pad
    return jnp.pad(w, ((0, k_pad - K), (0, n_pad - N))).astype(jnp.bfloat16)


def _pad_bias(b, n):
    b = b.astype(jnp.float32).reshape(1, -1)
    return jnp.pad(b, ((0, 0), (0, n - b.shape[1])))


# ----------------------------------------------------------------------------- conv GEMM (tiled)
def _conv_gemm_relu_kernel(x_ref, w_ref, b_ref, o_ref):
    y = jnp.dot(x_ref[...], w_ref[...], preferred_element_type=jnp.float32) + b_ref[...]
    o_ref[...] = jnp.maximum(y, 0.0)


def conv_gemm_relu(cols, w_pad, b):
    """cols: (M, K) f32 im2col patches; w_pad: (Kpad, Npad) bf16; b: (cout,) f32."""
    M, K = cols.shape
    Kpad, Npad = w_pad.shape
    TM = min(256, _round_up(M, 8))          # v7x-safe tile (fits 32 MiB scoped VMEM)
    Mpad = _round_up(M, TM)
    x = jnp.pad(cols.astype(jnp.bfloat16), ((0, Mpad - M), (0, Kpad - K)))
    b_pad = _pad_bias(b, Npad)
    grid = (Mpad // TM,)
    out = pl.pallas_call(
        _conv_gemm_relu_kernel,
        grid=grid,
        in_specs=[
            pl.BlockSpec((TM, Kpad), lambda i: (i, 0)),
            pl.BlockSpec((Kpad, Npad), lambda i: (0, 0)),   # weights resident in VMEM
            pl.BlockSpec((1, Npad), lambda i: (0, 0)),
        ],
        out_specs=pl.BlockSpec((TM, Npad), lambda i: (i, 0)),
        out_shape=jax.ShapeDtypeStruct((Mpad, Npad), jnp.float32),
        compiler_params=pltpu.CompilerParams(
            dimension_semantics=("parallel",),              # both TCs on v7x
            vmem_limit_bytes=32 * 1024 * 1024,
        ),
        cost_estimate=pl.CostEstimate(
            flops=2 * Mpad * Kpad * Npad,
            transcendentals=0,
            bytes_accessed=Mpad * Kpad * 2 + Kpad * Npad * 2 + Mpad * Npad * 4,
        ),
    )(x, w_pad, b_pad)
    return out[:M]


# ----------------------------------------------------------------------------- small GEMM (LSTM input proj.)
def _small_gemm_kernel(x_ref, w_ref, b_ref, o_ref, *, pre_act):
    x = x_ref[...]
    if pre_act == "tanh":
        x = jnp.tanh(x)                      # tanh(word2vec(qst)) fused here (layer 0)
    o_ref[...] = (
        jnp.dot(x.astype(jnp.bfloat16), w_ref[...], preferred_element_type=jnp.float32)
        + b_ref[...]
    )


def small_gemm(x, w, b, pre_act="none"):
    M = x.shape[0]
    N = w.shape[1]
    kern = functools.partial(_small_gemm_kernel, pre_act=pre_act)
    return pl.pallas_call(
        kern, out_shape=jax.ShapeDtypeStruct((M, N), jnp.float32)
    )(x, w, b.astype(jnp.float32).reshape(1, -1))


# ----------------------------------------------------------------------------- fused LSTM time scan
def _lstm_seq_kernel(gx_ref, whh_ref, hseq_ref, clast_ref, h_scr, c_scr):
    t = pl.program_id(0)

    @pl.when(t == 0)
    def _():
        h_scr[...] = jnp.zeros_like(h_scr)
        c_scr[...] = jnp.zeros_like(c_scr)

    H = h_scr.shape[-1]
    # x @ W_ih + b was hoisted out (gx); only the recurrent matmul happens here.
    gates = gx_ref[0] + jnp.dot(
        h_scr[...].astype(jnp.bfloat16), whh_ref[...], preferred_element_type=jnp.float32
    )
    i = jax.nn.sigmoid(gates[:, 0 * H:1 * H])
    f = jax.nn.sigmoid(gates[:, 1 * H:2 * H])
    g = jnp.tanh(gates[:, 2 * H:3 * H])
    o = jax.nn.sigmoid(gates[:, 3 * H:4 * H])
    c_new = f * c_scr[...] + i * g
    h_new = o * jnp.tanh(c_new)
    h_scr[...] = h_new
    c_scr[...] = c_new
    hseq_ref[0] = h_new
    clast_ref[...] = c_new


def lstm_scan(gates_x, whh):
    """gates_x: (T, B, 4H) f32 precomputed x@Wih+b; whh: (H, 4H) bf16."""
    T, B, G = gates_x.shape
    H = whh.shape[0]
    return pl.pallas_call(
        _lstm_seq_kernel,
        grid=(T,),
        in_specs=[
            pl.BlockSpec((1, B, G), lambda t: (t, 0, 0)),
            pl.BlockSpec((H, G), lambda t: (0, 0)),          # W_hh resident across T
        ],
        out_specs=[
            pl.BlockSpec((1, B, H), lambda t: (t, 0, 0)),
            pl.BlockSpec((B, H), lambda t: (0, 0)),
        ],
        out_shape=(
            jax.ShapeDtypeStruct((T, B, H), jnp.float32),
            jax.ShapeDtypeStruct((B, H), jnp.float32),
        ),
        scratch_shapes=[
            pltpu.VMEM((B, H), jnp.float32),                 # h carry
            pltpu.VMEM((B, H), jnp.float32),                 # c carry
        ],
        compiler_params=pltpu.CompilerParams(dimension_semantics=("arbitrary",)),
    )(gates_x, whh)


# ----------------------------------------------------------------------------- fused image-encoder tail
def _img_tail_kernel(x_ref, w1_ref, b1_ref, w2_ref, b2_ref, w3_ref, b3_ref, o_ref):
    h1 = jnp.maximum(
        jnp.dot(x_ref[...], w1_ref[...], preferred_element_type=jnp.float32) + b1_ref[...], 0.0)
    h2 = jnp.maximum(
        jnp.dot(h1.astype(jnp.bfloat16), w2_ref[...], preferred_element_type=jnp.float32)
        + b2_ref[...], 0.0)
    f = (jnp.dot(h2.astype(jnp.bfloat16), w3_ref[...], preferred_element_type=jnp.float32)
         + b3_ref[...])
    inv = jax.lax.rsqrt(jnp.sum(f * f, axis=1, keepdims=True) + 1e-12)   # L2 norm, div-safe
    o_ref[...] = f * inv


def img_tail(flat, fc1, fc2, fc3):
    w1, b1 = fc1
    w2, b2 = fc2
    w3, b3 = fc3
    B = flat.shape[0]
    EP = w3.shape[1]
    return pl.pallas_call(
        _img_tail_kernel,
        out_shape=jax.ShapeDtypeStruct((B, EP), jnp.float32),
    )(flat.astype(jnp.bfloat16),
      w1, _pad_bias(b1, w1.shape[1]),
      w2, _pad_bias(b2, w2.shape[1]),
      w3, _pad_bias(b3, EP))


# ----------------------------------------------------------------------------- fused qst_fc + fusion head
def _qst_fusion_kernel(qf_ref, img_ref, wq_ref, bq_ref, w1_ref, b1_ref, o_ref):
    # qst_feature = fc(tanh(cat(hidden, cell)))
    q = jnp.tanh(qf_ref[...])
    qst_feat = (jnp.dot(q.astype(jnp.bfloat16), wq_ref[...], preferred_element_type=jnp.float32)
                + bq_ref[...])
    # mul -> tanh -> (dropout=identity) -> fc1 -> tanh -> (dropout=identity) -> sigmoid
    comb = jnp.tanh(img_ref[...] * qst_feat)
    y = (jnp.dot(comb.astype(jnp.bfloat16), w1_ref[...], preferred_element_type=jnp.float32)
         + b1_ref[...])
    o_ref[...] = jax.nn.sigmoid(jnp.tanh(y))


def qst_fusion(qf, img_feat, wq, bq, w1, b1):
    B = qf.shape[0]
    APAD = w1.shape[1]
    return pl.pallas_call(
        _qst_fusion_kernel,
        out_shape=jax.ShapeDtypeStruct((B, APAD), jnp.float32),
    )(qf, img_feat, wq, _pad_bias(bq, wq.shape[1]), w1, _pad_bias(b1, APAD))


# ----------------------------------------------------------------------------- plain-JAX glue
def im2col_3x3_pad1(x_nhwc):
    B, H, W, C = x_nhwc.shape
    xp = jnp.pad(x_nhwc, ((0, 0), (1, 1), (1, 1), (0, 0)))
    cols = []
    for dy in range(3):
        for dx in range(3):
            cols.append(xp[:, dy: dy + H, dx: dx + W, :])
    patches = jnp.concatenate(cols, axis=-1)          # (B,H,W,9*C)
    return patches.reshape(B * H * W, 9 * C)


def maxpool2(x_nhwc):
    B, H, W, C = x_nhwc.shape
    x = x_nhwc.reshape(B, H // 2, 2, W // 2, 2, C)
    return jnp.max(x, axis=(2, 4))


# ----------------------------------------------------------------------------- params
def _uniform(key, shape, bound):
    return jax.random.uniform(key, shape, jnp.float32, -bound, bound)


def init_params(
    key,
    *,
    qst_vocab_size,
    ans_vocab_size,
    embed_size,
    word_embed_size,
    num_layers,
    hidden_size,
    img_hw,
    conv_channels=(8, 16),
    cls_feat=64,
):
    ks = iter(jax.random.split(key, 64))
    params = {}

    # scaled-down VGG-style conv stack (conv3x3 pad1 + ReLU + maxpool2 per block)
    convs = []
    cin = 3
    for cout in conv_channels:
        fan = 9 * cin
        bound = 1.0 / jnp.sqrt(fan)
        w = _uniform(next(ks), (9 * cin, cout), bound)
        b = _uniform(next(ks), (cout,), bound)
        convs.append((_pad_w(w, _round_up(9 * cin, LANE), _round_up(cout, LANE)), b))
        cin = cout
    params["convs"] = convs

    flat = (img_hw // (2 ** len(conv_channels))) ** 2 * conv_channels[-1]
    CP = _round_up(cls_feat, LANE)
    EP = _round_up(embed_size, LANE)
    APAD = _round_up(ans_vocab_size, LANE)

    w = _uniform(next(ks), (flat, cls_feat), 1.0 / jnp.sqrt(flat))
    b = _uniform(next(ks), (cls_feat,), 1.0 / jnp.sqrt(flat))
    params["cls_fc1"] = (_pad_w(w, None, CP), b)

    w = _uniform(next(ks), (cls_feat, cls_feat), 1.0 / jnp.sqrt(cls_feat))
    b = _uniform(next(ks), (cls_feat,), 1.0 / jnp.sqrt(cls_feat))
    params["cls_fc2"] = (_pad_w(w, CP, CP), b)

    # ImgEncoder_VGG.fc : in_features -> embed_size
    w = _uniform(next(ks), (cls_feat, embed_size), 1.0 / jnp.sqrt(cls_feat))
    b = _uniform(next(ks), (embed_size,), 1.0 / jnp.sqrt(cls_feat))
    params["img_fc"] = (_pad_w(w, CP, EP), b)

    # QstEncoder
    params["embed_table"] = jax.random.normal(
        next(ks), (qst_vocab_size, word_embed_size), jnp.float32
    )
    lstm = []
    for layer in range(num_layers):
        isz = word_embed_size if layer == 0 else hidden_size
        bound = 1.0 / jnp.sqrt(hidden_size)
        wih = _uniform(next(ks), (isz, 4 * hidden_size), bound).astype(jnp.bfloat16)
        whh = _uniform(next(ks), (hidden_size, 4 * hidden_size), bound).astype(jnp.bfloat16)
        b_ih = _uniform(next(ks), (4 * hidden_size,), bound)
        b_hh = _uniform(next(ks), (4 * hidden_size,), bound)
        lstm.append((wih, whh, b_ih + b_hh))
    params["lstm"] = lstm

    qin = 2 * num_layers * hidden_size
    w = _uniform(next(ks), (qin, embed_size), 1.0 / jnp.sqrt(qin))
    b = _uniform(next(ks), (embed_size,), 1.0 / jnp.sqrt(qin))
    params["qst_fc"] = (_pad_w(w, _round_up(qin, LANE), EP), b)

    # classifier head (fc1: embed -> ans_vocab)
    w = _uniform(next(ks), (embed_size, ans_vocab_size), 1.0 / jnp.sqrt(embed_size))
    b = _uniform(next(ks), (ans_vocab_size,), 1.0 / jnp.sqrt(embed_size))
    params["fc1"] = (_pad_w(w, EP, APAD), b)
    return params


# ----------------------------------------------------------------------------- forward
def vqa_forward(params, img, qst):
    """img: (B, 3, H, W) float32 NCHW.  qst: (T, B) int32."""
    # ---------------- image encoder (scaled-down VGG-style) ----------------
    x = jnp.transpose(img, (0, 2, 3, 1))                     # NCHW -> NHWC
    for w_pad, b in params["convs"]:
        B, H, W, _ = x.shape
        cout = b.shape[0]
        cols = im2col_3x3_pad1(x)                            # (B*H*W, 9*Cin)
        y = conv_gemm_relu(cols, w_pad, b)                   # tiled conv-as-GEMM + ReLU
        x = maxpool2(y[:, :cout].reshape(B, H, W, cout))
    Bsz = x.shape[0]
    flat = x.reshape(Bsz, -1)
    # fused: cls_fc1 -> relu -> cls_fc2 -> relu -> img_fc -> L2 norm  (embed kept lane-padded)
    img_feat = img_tail(flat, params["cls_fc1"], params["cls_fc2"], params["img_fc"])

    # ---------------- question encoder ----------------
    T, Bq = qst.shape
    emb = jnp.take(params["embed_table"], qst.reshape(-1), axis=0)   # gather, (T*B, Wd)

    hs, cs = [], []
    inp, pre = emb, "tanh"                                   # tanh(word2vec) fused into layer-0 GEMM
    for wih, whh, b in params["lstm"]:
        gx = small_gemm(inp, wih, b, pre_act=pre)            # hoisted x@Wih+b for all T
        h_seq, c_last = lstm_scan(gx.reshape(T, Bq, -1), whh)
        hs.append(h_seq[-1])
        cs.append(c_last)
        inp, pre = h_seq.reshape(T * Bq, -1), "none"

    hidden = jnp.stack(hs, 0)                                # (L, B, H)
    cell = jnp.stack(cs, 0)                                  # (L, B, H)
    qf = jnp.concatenate([hidden, cell], axis=2)             # (L, B, 2H)
    qf = jnp.transpose(qf, (1, 0, 2)).reshape(Bq, -1)        # (B, 2*L*H)

    # ---------------- fused qst_fc + fusion + classifier head ----------------
    wq, bq = params["qst_fc"]
    w1, b1 = params["fc1"]
    out = qst_fusion(qf, img_feat, wq, bq, w1, b1)           # (B, APAD)
    return out[:, : b1.shape[0]]


# ----------------------------------------------------------------------------- main
if __name__ == "__main__":
    B = 2            # batch
    IMG_HW = 16      # image spatial size
    T = 8            # question sequence length
    QST_VOCAB = 50
    ANS_VOCAB = 2    # binary yes/no
    EMBED = 64
    WORD_EMBED = 32
    NUM_LAYERS = 2
    HIDDEN = 32

    key = jax.random.PRNGKey(0)
    k_param, k_img, k_qst = jax.random.split(key, 3)

    params = init_params(
        k_param,
        qst_vocab_size=QST_VOCAB,
        ans_vocab_size=ANS_VOCAB,
        embed_size=EMBED,
        word_embed_size=WORD_EMBED,
        num_layers=NUM_LAYERS,
        hidden_size=HIDDEN,
        img_hw=IMG_HW,
    )

    img = jax.random.normal(k_img, (B, 3, IMG_HW, IMG_HW), jnp.float32)  # NCHW
    qst = jax.random.randint(k_qst, (T, B), 0, QST_VOCAB, jnp.int32)     # (seq, batch)

    out = jax.jit(vqa_forward)(params, img, qst)
    out = jax.block_until_ready(out)

    assert out.shape == (B, ANS_VOCAB), out.shape
    assert bool(jnp.all(jnp.isfinite(out)))
    assert bool(jnp.all((out >= 0.0) & (out <= 1.0)))   # sigmoid output range
    print("KERNEL_OK")
</pallas_src>

<mosaic_0001>
module attributes {stable_mosaic.version = 11 : i64} {
  func.func @_conv_gemm_relu_kernel(%arg0: i32, %arg1: memref<256x128xbf16, #tpu.memory_space<vmem>>, %arg2: memref<128x128xbf16, #tpu.memory_space<vmem>>, %arg3: memref<1x128xf32, #tpu.memory_space<vmem>>, %arg4: memref<256x128xf32, #tpu.memory_space<vmem>>) attributes {dimension_semantics = [#tpu.dimension_semantics<parallel>], iteration_bounds = array<i64: 2>, scalar_prefetch = 0 : i64, scratch_operands = 0 : i64, tpu.core_type = #tpu.core_type<tc>, window_params = [{transform_indices = @transform_0, window_bounds = array<i64: 256, 128>}, {pipeline_mode = #tpu.pipeline_mode<synchronous>, transform_indices = @transform_1, window_bounds = array<i64: 128, 128>}, {pipeline_mode = #tpu.pipeline_mode<synchronous>, transform_indices = @transform_2, window_bounds = array<i64: 1, 128>}, {transform_indices = @transform_3, window_bounds = array<i64: 256, 128>}]} {
    %c0 = arith.constant 0 : index
    %c0_0 = arith.constant 0 : index
    %0 = vector.load %arg1[%c0, %c0_0] : memref<256x128xbf16, #tpu.memory_space<vmem>>, vector<256x128xbf16>
    %c0_1 = arith.constant 0 : index
    %c0_2 = arith.constant 0 : index
    %1 = vector.load %arg2[%c0_1, %c0_2] : memref<128x128xbf16, #tpu.memory_space<vmem>>, vector<128x128xbf16>
    %cst = arith.constant dense<0.000000e+00> : vector<256x128xf32>
    %2 = tpu.matmul %0, %1, %cst {dimension_numbers = #tpu.dot_dimension_numbers<[1], [0], [0], [1], [0, 0, 1, 1], [], []>} : vector<256x128xbf16>, vector<128x128xbf16>, vector<256x128xf32> -> vector<256x128xf32>
    %c0_3 = arith.constant 0 : index
    %c0_4 = arith.constant 0 : index
    %3 = vector.load %arg3[%c0_3, %c0_4] : memref<1x128xf32, #tpu.memory_space<vmem>>, vector<1x128xf32>
    %4 = vector.broadcast %3 : vector<1x128xf32> to vector<256x128xf32>
    %5 = arith.addf %2, %4 : vector<256x128xf32>
    %cst_5 = arith.constant 0.000000e+00 : f32
    %6 = vector.broadcast %cst_5 : f32 to vector<256x128xf32>
    %7 = arith.maximumf %5, %6 : vector<256x128xf32>
    %c0_6 = arith.constant 0 : index
    %c0_7 = arith.constant 0 : index
    %8 = vector.load %arg4[%c0_6, %c0_7] : memref<256x128xf32, #tpu.memory_space<vmem>>, vector<256x128xf32>
    tpu.vector_store %arg4[%c0_6, %c0_7], %7 {strides = array<i32>} : memref<256x128xf32, #tpu.memory_space<vmem>>, vector<256x128xf32>,
    return
  }
  func.func @transform_0(%arg0: i32) -> (i32, i32) {
    %c0_i32 = arith.constant 0 : i32
    %c0_i32_0 = arith.constant 0 : i32
    return %arg0, %c0_i32 : i32, i32
  }
  func.func @transform_1(%arg0: i32) -> (i32, i32) {
    %c0_i32 = arith.constant 0 : i32
    %c0_i32_0 = arith.constant 0 : i32
    %c0_i32_1 = arith.constant 0 : i32
    return %c0_i32, %c0_i32_0 : i32, i32
  }
  func.func @transform_2(%arg0: i32) -> (i32, i32) {
    %c0_i32 = arith.constant 0 : i32
    %c0_i32_0 = arith.constant 0 : i32
    %c0_i32_1 = arith.constant 0 : i32
    return %c0_i32, %c0_i32_0 : i32, i32
  }
  func.func @transform_3(%arg0: i32) -> (i32, i32) {
    %c0_i32 = arith.constant 0 : i32
    %c0_i32_0 = arith.constant 0 : i32
    return %arg0, %c0_i32 : i32, i32
  }
}

module attributes {stable_mosaic.version = 11 : i64} {
  func.func @_conv_gemm_relu_kernel(%arg0: i32, %arg1: memref<128x128xbf16, #tpu.memory_space<vmem>>, %arg2: memref<128x128xbf16, #tpu.memory_space<vmem>>, %arg3: memref<1x128xf32, #tpu.memory_space<vmem>>, %arg4: memref<128x128xf32, #tpu.memory_space<vmem>>) attributes {dimension_semantics = [#tpu.dimension_semantics<parallel>], iteration_bounds = array<i64: 1>, scalar_prefetch = 0 : i64, scratch_operands = 0 : i64, tpu.core_type = #tpu.core_type<tc>, window_params = [{transform_indices = @transform_0, window_bounds = array<i64: 128, 128>}, {pipeline_mode = #tpu.pipeline_mode<synchronous>, transform_indices = @transform_1, window_bounds = array<i64: 128, 128>}, {pipeline_mode = #tpu.pipeline_mode<synchronous>, transform_indices = @transform_2, window_bounds = array<i64: 1, 128>}, {transform_indices = @transform_3, window_bounds = array<i64: 128, 128>}]} {
    %c0 = arith.constant 0 : index
    %c0_0 = arith.constant 0 : index
    %0 = vector.load %arg1[%c0, %c0_0] : memref<128x128xbf16, #tpu.memory_space<vmem>>, vector<128x128xbf16>
    %c0_1 = arith.constant 0 : index
    %c0_2 = arith.constant 0 : index
    %1 = vector.load %arg2[%c0_1, %c0_2] : memref<128x128xbf16, #tpu.memory_space<vmem>>, vector<128x128xbf16>
    %cst = arith.constant dense<0.000000e+00> : vector<128x128xf32>
    %2 = tpu.matmul %0, %1, %cst {dimension_numbers = #tpu.dot_dimension_numbers<[1], [0], [0], [1], [0, 0, 1, 1], [], []>} : vector<128x128xbf16>, vector<128x128xbf16>, vector<128x128xf32> -> vector<128x128xf32>
    %c0_3 = arith.constant 0 : index
    %c0_4 = arith.constant 0 : index
    %3 = vector.load %arg3[%c0_3, %c0_4] : memref<1x128xf32, #tpu.memory_space<vmem>>, vector<1x128xf32>
    %4 = vector.broadcast %3 : vector<1x128xf32> to vector<128x128xf32>
    %5 = arith.addf %2, %4 : vector<128x128xf32>
    %cst_5 = arith.constant 0.000000e+00 : f32
    %6 = vector.broadcast %cst_5 : f32 to vector<128x128xf32>
    %7 = arith.maximumf %5, %6 : vector<128x128xf32>
    %c0_6 = arith.constant 0 : index
    %c0_7 = arith.constant 0 : index
    %8 = vector.load %arg4[%c0_6, %c0_7] : memref<128x128xf32, #tpu.memory_space<vmem>>, vector<128x128xf32>
    tpu.vector_store %arg4[%c0_6, %c0_7], %7 {strides = array<i32>} : memref<128x128xf32, #tpu.memory_space<vmem>>, vector<128x128xf32>,
    return
  }
  func.func @transform_0(%arg0: i32) -> (i32, i32) {
    %c0_i32 = arith.constant 0 : i32
    %c0_i32_0 = arith.constant 0 : i32
    return %arg0, %c0_i32 : i32, i32
  }
  func.func @transform_1(%arg0: i32) -> (i32, i32) {
    %c0_i32 = arith.constant 0 : i32
    %c0_i32_0 = arith.constant 0 : i32
    %c0_i32_1 = arith.constant 0 : i32
    return %c0_i32, %c0_i32_0 : i32, i32
  }
  func.func @transform_2(%arg0: i32) -> (i32, i32) {
    %c0_i32 = arith.constant 0 : i32
    %c0_i32_0 = arith.constant 0 : i32
    %c0_i32_1 = arith.constant 0 : i32
    return %c0_i32, %c0_i32_0 : i32, i32
  }
  func.func @transform_3(%arg0: i32) -> (i32, i32) {
    %c0_i32 = arith.constant 0 : i32
    %c0_i32_0 = arith.constant 0 : i32
    return %arg0, %c0_i32 : i32, i32
  }
}

module attributes {stable_mosaic.version = 11 : i64} {
  func.func @_img_tail_kernel(%arg0: memref<2x256xbf16, #tpu.memory_space<vmem>>, %arg1: memref<256x128xbf16, #tpu.memory_space<vmem>>, %arg2: memref<1x128xf32, #tpu.memory_space<vmem>>, %arg3: memref<128x128xbf16, #tpu.memory_space<vmem>>, %arg4: memref<1x128xf32, #tpu.memory_space<vmem>>, %arg5: memref<128x128xbf16, #tpu.memory_space<vmem>>, %arg6: memref<1x128xf32, #tpu.memory_space<vmem>>, %arg7: memref<2x128xf32, #tpu.memory_space<vmem>>) attributes {dimension_semantics = [], scalar_prefetch = 0 : i64, scratch_operands = 0 : i64, tpu.core_type = #tpu.core_type<tc>} {
    %c0 = arith.constant 0 : index
    %c0_0 = arith.constant 0 : index
    %0 = vector.load %arg0[%c0, %c0_0] : memref<2x256xbf16, #tpu.memory_space<vmem>>, vector<2x256xbf16>
    %c0_1 = arith.constant 0 : index
    %c0_2 = arith.constant 0 : index
    %1 = vector.load %arg1[%c0_1, %c0_2] : memref<256x128xbf16, #tpu.memory_space<vmem>>, vector<256x128xbf16>
    %cst = arith.constant dense<0.000000e+00> : vector<2x128xf32>
    %2 = tpu.matmul %0, %1, %cst {dimension_numbers = #tpu.dot_dimension_numbers<[1], [0], [0], [1], [0, 0, 1, 1], [], []>} : vector<2x256xbf16>, vector<256x128xbf16>, vector<2x128xf32> -> vector<2x128xf32>
    %c0_3 = arith.constant 0 : index
    %c0_4 = arith.constant 0 : index
    %3 = vector.load %arg2[%c0_3, %c0_4] : memref<1x128xf32, #tpu.memory_space<vmem>>, vector<1x128xf32>
    %4 = vector.broadcast %3 : vector<1x128xf32> to vector<2x128xf32>
    %5 = arith.addf %2, %4 : vector<2x128xf32>
    %cst_5 = arith.constant 0.000000e+00 : f32
    %6 = vector.broadcast %cst_5 : f32 to vector<2x128xf32>
    %7 = arith.maximumf %5, %6 : vector<2x128xf32>
    %8 = arith.truncf %7 : vector<2x128xf32> to vector<2x128xbf16>
    %c0_6 = arith.constant 0 : index
    %c0_7 = arith.constant 0 : index
    %9 = vector.load %arg3[%c0_6, %c0_7] : memref<128x128xbf16, #tpu.memory_space<vmem>>, vector<128x128xbf16>
    %cst_8 = arith.constant dense<0.000000e+00> : vector<2x128xf32>
    %10 = tpu.matmul %8, %9, %cst_8 {dimension_numbers = #tpu.dot_dimension_numbers<[1], [0], [0], [1], [0, 0, 1, 1], [], []>} : vector<2x128xbf16>, vector<128x128xbf16>, vector<2x128xf32> -> vector<2x128xf32>
    %c0_9 = arith.constant 0 : index
    %c0_10 = arith.constant 0 : index
    %11 = vector.load %arg4[%c0_9, %c0_10] : memref<1x128xf32, #tpu.memory_space<vmem>>, vector<1x128xf32>
    %12 = vector.broadcast %11 : vector<1x128xf32> to vector<2x128xf32>
    %13 = arith.addf %10, %12 : vector<2x128xf32>
    %cst_11 = arith.constant 0.000000e+00 : f32
    %14 = vector.broadcast %cst_11 : f32 to vector<2x128xf32>
    %15 = arith.maximumf %13, %14 : vector<2x128xf32>
    %16 = arith.truncf %15 : vector<2x128xf32> to vector<2x128xbf16>
    %c0_12 = arith.constant 0 : index
    %c0_13 = arith.constant 0 : index
    %17 = vector.load %arg5[%c0_12, %c0_13] : memref<128x128xbf16, #tpu.memory_space<vmem>>, vector<128x128xbf16>
    %cst_14 = arith.constant dense<0.000000e+00> : vector<2x128xf32>
    %18 = tpu.matmul %16, %17, %cst_14 {dimension_numbers = #tpu.dot_dimension_numbers<[1], [0], [0], [1], [0, 0, 1, 1], [], []>} : vector<2x128xbf16>, vector<128x128xbf16>, vector<2x128xf32> -> vector<2x128xf32>
    %c0_15 = arith.constant 0 : index
    %c0_16 = arith.constant 0 : index
    %19 = vector.load %arg6[%c0_15, %c0_16] : memref<1x128xf32, #tpu.memory_space<vmem>>, vector<1x128xf32>
    %20 = vector.broadcast %19 : vector<1x128xf32> to vector<2x128xf32>
    %21 = arith.addf %18, %20 : vector<2x128xf32>
    %22 = arith.mulf %21, %21 : vector<2x128xf32>
    %cst_17 = arith.constant dense<0.000000e+00> : vector<2xf32>
    %23 = vector.multi_reduction <add>, %22, %cst_17 [1] : vector<2x128xf32> to vector<2xf32>
    %24 = vector.shape_cast %23 : vector<2xf32> to vector<2x1xf32>
    %cst_18 = arith.constant 9.99999996E-13 : f32
    %25 = vector.broadcast %cst_18 : f32 to vector<2x1xf32>
    %26 = arith.addf %24, %25 : vector<2x1xf32>
    %27 = math.rsqrt %26 : vector<2x1xf32>
    %28 = vector.broadcast %27 : vector<2x1xf32> to vector<2x128xf32>
    %29 = arith.mulf %21, %28 : vector<2x128xf32>
    %c0_19 = arith.constant 0 : index
    %c0_20 = arith.constant 0 : index
    %30 = vector.load %arg7[%c0_19, %c0_20] : memref<2x128xf32, #tpu.memory_space<vmem>>, vector<2x128xf32>
    tpu.vector_store %arg7[%c0_19, %c0_20], %29 {strides = array<i32>} : memref<2x128xf32, #tpu.memory_space<vmem>>, vector<2x128xf32>,
    return
  }
}

module attributes {stable_mosaic.version = 11 : i64} {
  func.func @_small_gemm_kernel(%arg0: memref<16x32xf32, #tpu.memory_space<vmem>>, %arg1: memref<32x128xbf16, #tpu.memory_space<vmem>>, %arg2: memref<1x128xf32, #tpu.memory_space<vmem>>, %arg3: memref<16x128xf32, #tpu.memory_space<vmem>>) attributes {dimension_semantics = [], scalar_prefetch = 0 : i64, scratch_operands = 0 : i64, tpu.core_type = #tpu.core_type<tc>} {
    %c0 = arith.constant 0 : index
    %c0_0 = arith.constant 0 : index
    %0 = vector.load %arg0[%c0, %c0_0] : memref<16x32xf32, #tpu.memory_space<vmem>>, vector<16x32xf32>
    %1 = math.tanh %0 : vector<16x32xf32>
    %2 = arith.truncf %1 : vector<16x32xf32> to vector<16x32xbf16>
    %c0_1 = arith.constant 0 : index
    %c0_2 = arith.constant 0 : index
    %3 = vector.load %arg1[%c0_1, %c0_2] : memref<32x128xbf16, #tpu.memory_space<vmem>>, vector<32x128xbf16>
    %cst = arith.constant dense<0.000000e+00> : vector<16x128xf32>
    %4 = tpu.matmul %2, %3, %cst {dimension_numbers = #tpu.dot_dimension_numbers<[1], [0], [0], [1], [0, 0, 1, 1], [], []>} : vector<16x32xbf16>, vector<32x128xbf16>, vector<16x128xf32> -> vector<16x128xf32>
    %c0_3 = arith.constant 0 : index
    %c0_4 = arith.constant 0 : index
    %5 = vector.load %arg2[%c0_3, %c0_4] : memref<1x128xf32, #tpu.memory_space<vmem>>, vector<1x128xf32>
    %6 = vector.broadcast %5 : vector<1x128xf32> to vector<16x128xf32>
    %7 = arith.addf %4, %6 : vector<16x128xf32>
    %c0_5 = arith.constant 0 : index
    %c0_6 = arith.constant 0 : index
    %8 = vector.load %arg3[%c0_5, %c0_6] : memref<16x128xf32, #tpu.memory_space<vmem>>, vector<16x128xf32>
    tpu.vector_store %arg3[%c0_5, %c0_6], %7 {strides = array<i32>} : memref<16x128xf32, #tpu.memory_space<vmem>>, vector<16x128xf32>,
    return
  }
}

module attributes {stable_mosaic.version = 11 : i64} {
  func.func @_lstm_seq_kernel(%arg0: i32, %arg1: memref<1x2x128xf32, #tpu.memory_space<vmem>>, %arg2: memref<32x128xbf16, #tpu.memory_space<vmem>>, %arg3: memref<1x2x32xf32, #tpu.memory_space<vmem>>, %arg4: memref<2x32xf32, #tpu.memory_space<vmem>>, %arg5: memref<2x32xf32, #tpu.memory_space<vmem>>, %arg6: memref<2x32xf32, #tpu.memory_space<vmem>>) attributes {dimension_semantics = [#tpu.dimension_semantics<arbitrary>], iteration_bounds = array<i64: 8>, scalar_prefetch = 0 : i64, scratch_operands = 2 : i64, tpu.core_type = #tpu.core_type<tc>, window_params = [{transform_indices = @transform_0, window_bounds = array<i64: 1, 2, 128>}, {pipeline_mode = #tpu.pipeline_mode<synchronous>, transform_indices = @transform_1, window_bounds = array<i64: 32, 128>}, {transform_indices = @transform_2, window_bounds = array<i64: 1, 2, 32>}, {pipeline_mode = #tpu.pipeline_mode<synchronous>, transform_indices = @transform_3, window_bounds = array<i64: 2, 32>}]} {
    %c0_i32 = arith.constant 0 : i32
    %0 = arith.cmpi eq, %arg0, %c0_i32 : i32
    %1 = arith.extui %0 : i1 to i32
    %c0_i32_0 = arith.constant 0 : i32
    %2 = arith.cmpi ne, %1, %c0_i32_0 : i32
    scf.if %2 {
      %cst_21 = arith.constant 0.000000e+00 : f32
      %42 = vector.broadcast %cst_21 : f32 to vector<2x32xf32>
      %c0_22 = arith.constant 0 : index
      %c0_23 = arith.constant 0 : index
      %43 = vector.load %arg5[%c0_22, %c0_23] : memref<2x32xf32, #tpu.memory_space<vmem>>, vector<2x32xf32>
      tpu.vector_store %arg5[%c0_22, %c0_23], %42 {strides = array<i32>} : memref<2x32xf32, #tpu.memory_space<vmem>>, vector<2x32xf32>,
      %cst_24 = arith.constant 0.000000e+00 : f32
      %44 = vector.broadcast %cst_24 : f32 to vector<2x32xf32>
      %c0_25 = arith.constant 0 : index
      %c0_26 = arith.constant 0 : index
      %45 = vector.load %arg6[%c0_25, %c0_26] : memref<2x32xf32, #tpu.memory_space<vmem>>, vector<2x32xf32>
      tpu.vector_store %arg6[%c0_25, %c0_26], %44 {strides = array<i32>} : memref<2x32xf32, #tpu.memory_space<vmem>>, vector<2x32xf32>,
    } else {
    }
    %c0 = arith.constant 0 : index
    %c0_1 = arith.constant 0 : index
    %c0_2 = arith.constant 0 : index
    %3 = vector.load %arg1[%c0, %c0_1, %c0_2] : memref<1x2x128xf32, #tpu.memory_space<vmem>>, vector<1x2x128xf32>
    %4 = vector.shape_cast %3 : vector<1x2x128xf32> to vector<2x128xf32>
    %c0_3 = arith.constant 0 : index
    %c0_4 = arith.constant 0 : index
    %5 = vector.load %arg5[%c0_3, %c0_4] : memref<2x32xf32, #tpu.memory_space<vmem>>, vector<2x32xf32>
    %6 = arith.truncf %5 : vector<2x32xf32> to vector<2x32xbf16>
    %c0_5 = arith.constant 0 : index
    %c0_6 = arith.constant 0 : index
    %7 = vector.load %arg2[%c0_5, %c0_6] : memref<32x128xbf16, #tpu.memory_space<vmem>>, vector<32x128xbf16>
    %cst = arith.constant dense<0.000000e+00> : vector<2x128xf32>
    %8 = tpu.matmul %6, %7, %cst {dimension_numbers = #tpu.dot_dimension_numbers<[1], [0], [0], [1], [0, 0, 1, 1], [], []>} : vector<2x32xbf16>, vector<32x128xbf16>, vector<2x128xf32> -> vector<2x128xf32>
    %9 = arith.addf %4, %8 : vector<2x128xf32>
    %10 = vector.extract_strided_slice %9 {offsets = [0, 0], sizes = [2, 32], strides = [1, 1]} : vector<2x128xf32> to vector<2x32xf32>
    %11 = arith.negf %10 : vector<2x32xf32>
    %12 = math.exp %11 : vector<2x32xf32>
    %cst_7 = arith.constant 1.000000e+00 : f32
    %13 = vector.broadcast %cst_7 : f32 to vector<2x32xf32>
    %14 = arith.addf %13, %12 : vector<2x32xf32>
    %15 = arith.divf %13, %14 : vector<2x32xf32>
    %16 = vector.extract_strided_slice %9 {offsets = [0, 32], sizes = [2, 32], strides = [1, 1]} : vector<2x128xf32> to vector<2x32xf32>
    %17 = arith.negf %16 : vector<2x32xf32>
    %18 = math.exp %17 : vector<2x32xf32>
    %cst_8 = arith.constant 1.000000e+00 : f32
    %19 = vector.broadcast %cst_8 : f32 to vector<2x32xf32>
    %20 = arith.addf %19, %18 : vector<2x32xf32>
    %21 = arith.divf %19, %20 : vector<2x32xf32>
    %22 = vector.extract_strided_slice %9 {offsets = [0, 64], sizes = [2, 32], strides = [1, 1]} : vector<2x128xf32> to vector<2x32xf32>
    %23 = math.tanh %22 : vector<2x32xf32>
    %24 = vector.extract_strided_slice %9 {offsets = [0, 96], sizes = [2, 32], strides = [1, 1]} : vector<2x128xf32> to vector<2x32xf32>
    %25 = arith.negf %24 : vector<2x32xf32>
    %26 = math.exp %25 : vector<2x32xf32>
    %cst_9 = arith.constant 1.000000e+00 : f32
    %27 = vector.broadcast %cst_9 : f32 to vector<2x32xf32>
    %28 = arith.addf %27, %26 : vector<2x32xf32>
    %29 = arith.divf %27, %28 : vector<2x32xf32>
    %c0_10 = arith.constant 0 : index
    %c0_11 = arith.constant 0 : index
    %30 = vector.load %arg6[%c0_10, %c0_11] : memref<2x32xf32, #tpu.memory_space<vmem>>, vector<2x32xf32>
    %31 = arith.mulf %21, %30 : vector<2x32xf32>
    %32 = arith.mulf %15, %23 : vector<2x32xf32>
    %33 = arith.addf %31, %32 : vector<2x32xf32>
    %34 = math.tanh %33 : vector<2x32xf32>
    %35 = arith.mulf %29, %34 : vector<2x32xf32>
    %c0_12 = arith.constant 0 : index
    %c0_13 = arith.constant 0 : index
    %36 = vector.load %arg5[%c0_12, %c0_13] : memref<2x32xf32, #tpu.memory_space<vmem>>, vector<2x32xf32>
    tpu.vector_store %arg5[%c0_12, %c0_13], %35 {strides = array<i32>} : memref<2x32xf32, #tpu.memory_space<vmem>>, vector<2x32xf32>,
    %c0_14 = arith.constant 0 : index
    %c0_15 = arith.constant 0 : index
    %37 = vector.load %arg6[%c0_14, %c0_15] : memref<2x32xf32, #tpu.memory_space<vmem>>, vector<2x32xf32>
    tpu.vector_store %arg6[%c0_14, %c0_15], %33 {strides = array<i32>} : memref<2x32xf32, #tpu.memory_space<vmem>>, vector<2x32xf32>,
    %c0_16 = arith.constant 0 : index
    %c0_17 = arith.constant 0 : index
    %c0_18 = arith.constant 0 : index
    %38 = vector.load %arg3[%c0_16, %c0_17, %c0_18] : memref<1x2x32xf32, #tpu.memory_space<vmem>>, vector<1x2x32xf32>
    %39 = vector.shape_cast %38 : vector<1x2x32xf32> to vector<2x32xf32>
    %40 = vector.shape_cast %35 : vector<2x32xf32> to vector<1x2x32xf32>
    tpu.vector_store %arg3[%c0_16, %c0_17, %c0_18], %40 {strides = array<i32>} : memref<1x2x32xf32, #tpu.memory_space<vmem>>, vector<1x2x32xf32>,
    %c0_19 = arith.constant 0 : index
    %c0_20 = arith.constant 0 : index
    %41 = vector.load %arg4[%c0_19, %c0_20] : memref<2x32xf32, #tpu.memory_space<vmem>>, vector<2x32xf32>
    tpu.vector_store %arg4[%c0_19, %c0_20], %33 {strides = array<i32>} : memref<2x32xf32, #tpu.memory_space<vmem>>, vector<2x32xf32>,
    return
  }
  func.func @transform_0(%arg0: i32) -> (i32, i32, i32) {
    %c0_i32 = arith.constant 0 : i32
    %c0_i32_0 = arith.constant 0 : i32
    %c0_i32_1 = arith.constant 0 : i32
    return %arg0, %c0_i32, %c0_i32_0 : i32, i32, i32
  }
  func.func @transform_1(%arg0: i32) -> (i32, i32) {
    %c0_i32 = arith.constant 0 : i32
    %c0_i32_0 = arith.constant 0 : i32
    %c0_i32_1 = arith.constant 0 : i32
    return %c0_i32, %c0_i32_0 : i32, i32
  }
  func.func @transform_2(%arg0: i32) -> (i32, i32, i32) {
    %c0_i32 = arith.constant 0 : i32
    %c0_i32_0 = arith.constant 0 : i32
    %c0_i32_1 = arith.constant 0 : i32
    return %arg0, %c0_i32, %c0_i32_0 : i32, i32, i32
  }
  func.func @transform_3(%arg0: i32) -> (i32, i32) {
    %c0_i32 = arith.constant 0 : i32
    %c0_i32_0 = arith.constant 0 : i32
    %c0_i32_1 = arith.constant 0 : i32
    return %c0_i32, %c0_i32_0 : i32, i32
  }
}

module attributes {stable_mosaic.version = 11 : i64} {
  func.func @_small_gemm_kernel(%arg0: memref<16x32xf32, #tpu.memory_space<vmem>>, %arg1: memref<32x128xbf16, #tpu.memory_space<vmem>>, %arg2: memref<1x128xf32, #tpu.memory_space<vmem>>, %arg3: memref<16x128xf32, #tpu.memory_space<vmem>>) attributes {dimension_semantics = [], scalar_prefetch = 0 : i64, scratch_operands = 0 : i64, tpu.core_type = #tpu.core_type<tc>} {
    %c0 = arith.constant 0 : index
    %c0_0 = arith.constant 0 : index
    %0 = vector.load %arg0[%c0, %c0_0] : memref<16x32xf32, #tpu.memory_space<vmem>>, vector<16x32xf32>
    %1 = arith.truncf %0 : vector<16x32xf32> to vector<16x32xbf16>
    %c0_1 = arith.constant 0 : index
    %c0_2 = arith.constant 0 : index
    %2 = vector.load %arg1[%c0_1, %c0_2] : memref<32x128xbf16, #tpu.memory_space<vmem>>, vector<32x128xbf16>
    %cst = arith.constant dense<0.000000e+00> : vector<16x128xf32>
    %3 = tpu.matmul %1, %2, %cst {dimension_numbers = #tpu.dot_dimension_numbers<[1], [0], [0], [1], [0, 0, 1, 1], [], []>} : vector<16x32xbf16>, vector<32x128xbf16>, vector<16x128xf32> -> vector<16x128xf32>
    %c0_3 = arith.constant 0 : index
    %c0_4 = arith.constant 0 : index
    %4 = vector.load %arg2[%c0_3, %c0_4] : memref<1x128xf32, #tpu.memory_space<vmem>>, vector<1x128xf32>
    %5 = vector.broadcast %4 : vector<1x128xf32> to vector<16x128xf32>
    %6 = arith.addf %3, %5 : vector<16x128xf32>
    %c0_5 = arith.constant 0 : index
    %c0_6 = arith.constant 0 : index
    %7 = vector.load %arg3[%c0_5, %c0_6] : memref<16x128xf32, #tpu.memory_space<vmem>>, vector<16x128xf32>
    tpu.vector_store %arg3[%c0_5, %c0_6], %6 {strides = array<i32>} : memref<16x128xf32, #tpu.memory_space<vmem>>, vector<16x128xf32>,
    return
  }
}

module attributes {stable_mosaic.version = 11 : i64} {
  func.func @_qst_fusion_kernel(%arg0: memref<2x128xf32, #tpu.memory_space<vmem>>, %arg1: memref<2x128xf32, #tpu.memory_space<vmem>>, %arg2: memref<128x128xbf16, #tpu.memory_space<vmem>>, %arg3: memref<1x128xf32, #tpu.memory_space<vmem>>, %arg4: memref<128x128xbf16, #tpu.memory_space<vmem>>, %arg5: memref<1x128xf32, #tpu.memory_space<vmem>>, %arg6: memref<2x128xf32, #tpu.memory_space<vmem>>) attributes {dimension_semantics = [], scalar_prefetch = 0 : i64, scratch_operands = 0 : i64, tpu.core_type = #tpu.core_type<tc>} {
    %c0 = arith.constant 0 : index
    %c0_0 = arith.constant 0 : index
    %0 = vector.load %arg0[%c0, %c0_0] : memref<2x128xf32, #tpu.memory_space<vmem>>, vector<2x128xf32>
    %1 = math.tanh %0 : vector<2x128xf32>
    %2 = arith.truncf %1 : vector<2x128xf32> to vector<2x128xbf16>
    %c0_1 = arith.constant 0 : index
    %c0_2 = arith.constant 0 : index
    %3 = vector.load %arg2[%c0_1, %c0_2] : memref<128x128xbf16, #tpu.memory_space<vmem>>, vector<128x128xbf16>
    %cst = arith.constant dense<0.000000e+00> : vector<2x128xf32>
    %4 = tpu.matmul %2, %3, %cst {dimension_numbers = #tpu.dot_dimension_numbers<[1], [0], [0], [1], [0, 0, 1, 1], [], []>} : vector<2x128xbf16>, vector<128x128xbf16>, vector<2x128xf32> -> vector<2x128xf32>
    %c0_3 = arith.constant 0 : index
    %c0_4 = arith.constant 0 : index
    %5 = vector.load %arg3[%c0_3, %c0_4] : memref<1x128xf32, #tpu.memory_space<vmem>>, vector<1x128xf32>
    %6 = vector.broadcast %5 : vector<1x128xf32> to vector<2x128xf32>
    %7 = arith.addf %4, %6 : vector<2x128xf32>
    %c0_5 = arith.constant 0 : index
    %c0_6 = arith.constant 0 : index
    %8 = vector.load %arg1[%c0_5, %c0_6] : memref<2x128xf32, #tpu.memory_space<vmem>>, vector<2x128xf32>
    %9 = arith.mulf %8, %7 : vector<2x128xf32>
    %10 = math.tanh %9 : vector<2x128xf32>
    %11 = arith.truncf %10 : vector<2x128xf32> to vector<2x128xbf16>
    %c0_7 = arith.constant 0 : index
    %c0_8 = arith.constant 0 : index
    %12 = vector.load %arg4[%c0_7, %c0_8] : memref<128x128xbf16, #tpu.memory_space<vmem>>, vector<128x128xbf16>
    %cst_9 = arith.constant dense<0.000000e+00> : vector<2x128xf32>
    %13 = tpu.matmul %11, %12, %cst_9 {dimension_numbers = #tpu.dot_dimension_numbers<[1], [0], [0], [1], [0, 0, 1, 1], [], []>} : vector<2x128xbf16>, vector<128x128xbf16>, vector<2x128xf32> -> vector<2x128xf32>
    %c0_10 = arith.constant 0 : index
    %c0_11 = arith.constant 0 : index
    %14 = vector.load %arg5[%c0_10, %c0_11] : memref<1x128xf32, #tpu.memory_space<vmem>>, vector<1x128xf32>
    %15 = vector.broadcast %14 : vector<1x128xf32> to vector<2x128xf32>
    %16 = arith.addf %13, %15 : vector<2x128xf32>
    %17 = math.tanh %16 : vector<2x128xf32>
    %18 = arith.negf %17 : vector<2x128xf32>
    %19 = math.exp %18 : vector<2x128xf32>
    %cst_12 = arith.constant 1.000000e+00 : f32
    %20 = vector.broadcast %cst_12 : f32 to vector<2x128xf32>
    %21 = arith.addf %20, %19 : vector<2x128xf32>
    %22 = arith.divf %20, %21 : vector<2x128xf32>
    %c0_13 = arith.constant 0 : index
    %c0_14 = arith.constant 0 : index
    %23 = vector.load %arg6[%c0_13, %c0_14] : memref<2x128xf32, #tpu.memory_space<vmem>>, vector<2x128xf32>
    tpu.vector_store %arg6[%c0_13, %c0_14], %22 {strides = array<i32>} : memref<2x128xf32, #tpu.memory_space<vmem>>, vector<2x128xf32>,
    return
  }
}

</mosaic_0001>

<llo_original>
// kernel: vqa_forward.8
$region0: #{vqa_forward.8}
  #allocation0 [shape = 'u32[]', space=smem, size = 0x4, offset = 0x4, fixed_abs, tag = 'smem constant byte address 0x4 - core index']
  #allocation1 [shape = 'u32[72,128]{1,0:T(1,128)}', space=vmem, size = 0x9000, scoped, tag = 'internal scratch']
  %s0 = inlined_call_operand.vmem [shape: bf16[512,128], index: 0, kind: input, shape index: {}]
  %s1 = inlined_call_operand.vmem [shape: bf16[128,128], index: 1, kind: input, shape index: {}]
  %s2 = inlined_call_operand.vmem [shape: f32[1,128], index: 2, kind: input, shape index: {}]
  %s3 = inlined_call_operand.vmem [shape: f32[512,128], index: 3, kind: output, shape index: {}]
  %s4 = sld [smem:[#allocation0]]
  $region45: #{vqa_forward.8} parent=0
    _
  %s6 = ssub.s32 1, %s4
  %s7 = scalar_select 0, %s6, %s4
  loop: start=0, step=1, limit=4
  $region2: #{vqa_forward.8} parent=0 // loop_pre_header
    _
  $region3: #{vqa_forward.8} parent=0 // loop_header
    %s9 = sphi 0, %s13
    %p10 = scmp.ge.s32.totalorder %s9, 4
    %s19 = sphi 0, %s21
    %s22 = sphi 0, %s19
    %s23 = sphi 0, %s22
    %s39 = sphi 0, %s23
    %s43 = sphi 0, %s43
    %s45 = sphi 0, %s43
    %s46 = sphi 0, %s45
    %s60 = sphi 0, %s46
    %s64 = sphi 0, %s64
    %s66 = sphi 0, %s64
    %s67 = sphi 0, %s66
    %s81 = sphi 0, %s67
    %s87 = sphi 0, %s89
    %s90 = sphi 0, %s87
    %s91 = sphi 0, %s90
    %s107 = sphi 0, %s91
  $region4: #{vqa_forward.8} parent=0 // loop_header_branch
    %12 = sbr.rel (%p10) target = $region8
  $region5: #{vqa_forward.8} parent=0 // loop_body
    %s14 = ssub.s32 %s9, 1
    %s15 = ssub.s32 %s9, 2
    %s16 = sadd.s32 %s9, 1
    %s17 = ssub.s32 %s9, %s16
    %p18 = scmp.eq.s32.totalorder %s17, 0
    %s20 = sadd.s32 %s19, 1
    %s21 = scalar_select %p18, %s19, %s20
    %p24 = pneg %p18
    %p25 = scmp.eq.s32.totalorder %s9, 1
    %p26 = por %p24, %p25
    %p27 = scmp.ne.s32.totalorder %s19, %s22
    %p28 = scmp.eq.s32.totalorder %s9, 0
    %p29 = por %p27, %p28
    %p30 = scmp.ne.s32.totalorder %s19, %s22
    %p31 = scmp.eq.s32.totalorder %s14, 1
    %p32 = por %p30, %p31
    %p33 = scmp.ne.s32.totalorder %s22, %s23
    %p34 = scmp.eq.s32.totalorder %s14, 0
    %p35 = por %p33, %p34
    %p36 = scmp.ne.s32.totalorder %s22, %s23
    %p37 = scmp.eq.s32.totalorder %s15, 1
    %p38 = por %p36, %p37
    %p40 = scmp.ne.s32.totalorder %s23, %s39
    %p41 = scmp.eq.s32.totalorder %s15, 0
    %p42 = por %p40, %p41
    %s44 = sadd.s32 %s43, 1
    %p47 = scmp.eq.s32.totalorder %s9, 1
    %p48 = scmp.ne.s32.totalorder %s43, %s45
    %p49 = scmp.eq.s32.totalorder %s9, 0
    %p50 = por %p48, %p49
    %p51 = scmp.ne.s32.totalorder %s43, %s45
    %p52 = scmp.eq.s32.totalorder %s14, 1
    %p53 = por %p51, %p52
    %p54 = scmp.ne.s32.totalorder %s45, %s46
    %p55 = scmp.eq.s32.totalorder %s14, 0
    %p56 = por %p54, %p55
    %p57 = scmp.ne.s32.totalorder %s45, %s46
    %p58 = scmp.eq.s32.totalorder %s15, 1
    %p59 = por %p57, %p58
    %p61 = scmp.ne.s32.totalorder %s46, %s60
    %p62 = scmp.eq.s32.totalorder %s15, 0
    %p63 = por %p61, %p62
    %s65 = sadd.s32 %s64, 1
    %p68 = scmp.eq.s32.totalorder %s9, 1
    %p69 = scmp.ne.s32.totalorder %s64, %s66
    %p70 = scmp.eq.s32.totalorder %s9, 0
    %p71 = por %p69, %p70
    %p72 = scmp.ne.s32.totalorder %s64, %s66
    %p73 = scmp.eq.s32.totalorder %s14, 1
    %p74 = por %p72, %p73
    %p75 = scmp.ne.s32.totalorder %s66, %s67
    %p76 = scmp.eq.s32.totalorder %s14, 0
    %p77 = por %p75, %p76
    %p78 = scmp.ne.s32.totalorder %s66, %s67
    %p79 = scmp.eq.s32.totalorder %s15, 1
    %p80 = por %p78, %p79
    %p82 = scmp.ne.s32.totalorder %s67, %s81
    %p83 = scmp.eq.s32.totalorder %s15, 0
    %p84 = por %p82, %p83
    %s85 = ssub.s32 %s9, %s16
    %p86 = scmp.eq.s32.totalorder %s85, 0
    %s88 = sadd.s32 %s87, 1
    %s89 = scalar_select %p86, %s87, %s88
    %p92 = pneg %p86
    %p93 = scmp.eq.s32.totalorder %s9, 1
    %p94 = por %p92, %p93
    %p95 = scmp.ne.s32.totalorder %s87, %s90
    %p96 = scmp.eq.s32.totalorder %s9, 0
    %p97 = por %p95, %p96
    %p98 = scmp.ne.s32.totalorder %s87, %s90
    %p99 = scmp.eq.s32.totalorder %s14, 1
    %p100 = por %p98, %p99
    %p101 = scmp.ne.s32.totalorder %s90, %s91
    %p102 = scmp.eq.s32.totalorder %s14, 0
    %p103 = por %p101, %p102
    %p104 = scmp.ne.s32.totalorder %s90, %s91
    %p105 = scmp.eq.s32.totalorder %s15, 1
    %p106 = por %p104, %p105
    %p108 = scmp.ne.s32.totalorder %s91, %s107
    %p109 = scmp.eq.s32.totalorder %s15, 0
    %p110 = por %p108, %p109
    %p111 = scmp.le.s32.totalorder 1, %s9
    %p112 = scmp.lt.s32.totalorder %s9, 3
    %p113 = pnand %p111, %p112
    %p114 = pneg %p113
    // Predicated region
    $region9: #{vqa_forward.8} parent=5 // pred_check
      _
    $region10: #{vqa_forward.8} parent=5 // pred_check_branch
      %116 = sbr.rel (%p113) target = $region12
    $region11: #{vqa_forward.8} parent=5 // pred_region
      %s117 = ssub.s32 %s9, 1
      // Predicated region
      $region13: #{vqa_forward.8} parent=11 // pred_check
        %p118 = pneg %p56
      $region14: #{vqa_forward.8} parent=11 // pred_check_branch
        %120 = sbr.rel (%p118) target = $region16
      $region15: #{vqa_forward.8} parent=11 // pred_region
        _
      $region16: #{vqa_forward.8} parent=11 // pred_fallthru
        _
      // Predicated region
      $region17: #{vqa_forward.8} parent=11 // pred_check
        %p121 = pneg %p77
      $region18: #{vqa_forward.8} parent=11 // pred_check_branch
        %123 = sbr.rel (%p121) target = $region20
      $region19: #{vqa_forward.8} parent=11 // pred_region
        _
      $region20: #{vqa_forward.8} parent=11 // pred_fallthru
        _
    $region12: #{vqa_forward.8} parent=5 // pred_fallthru
      _
    %p124 = scmp.lt.s32.totalorder %s9, 2
    // Predicated region
    $region21: #{vqa_forward.8} parent=5 // pred_check
      %p125 = pneg %p124
    $region22: #{vqa_forward.8} parent=5 // pred_check_branch
      %127 = sbr.rel (%p125) target = $region24
    $region23: #{vqa_forward.8} parent=5 // pred_region
      // Predicated region
      $region25: #{vqa_forward.8} parent=23 // pred_check
        %p128 = pneg %p29
      $region26: #{vqa_forward.8} parent=23 // pred_check_branch
        %130 = sbr.rel (%p128) target = $region28
      $region27: #{vqa_forward.8} parent=23 // pred_region
        %s131 = smul.u32 32, %s9
        %p132 = scmp.lt.s32.totalorder %s131, 63
        %s133 = scalar_select %p132, %s131, 63
        %s134 = smul.addr %s133, 4
        %s135 = scalar_lea.vmem %s0, %s134
        %s136 = smul.u32 32, %s9
      $region28: #{vqa_forward.8} parent=23 // pred_fallthru
        _
    $region24: #{vqa_forward.8} parent=5 // pred_fallthru
      _
    %p137 = scmp.le.s32.totalorder 1, %s9
    %p138 = scmp.lt.s32.totalorder %s9, 3
    %p139 = pnand %p137, %p138
    %p140 = pneg %p139
    // Predicated region
    $region29: #{vqa_forward.8} parent=5 // pred_check
      _
    $region30: #{vqa_forward.8} parent=5 // pred_check_branch
      %142 = sbr.rel (%p139) target = $region32
    $region31: #{vqa_forward.8} parent=5 // pred_region
      %s143 = ssub.s32 %s9, 1
      %s144 = smul.u32 32, %s14
      %p145 = scmp.lt.s32.totalorder %s144, 63
      %s146 = scalar_select %p145, %s144, 63
      %s147 = smul.addr %s146, 4
      %s148 = scalar_lea.vmem %s0, %s147
      %p149 = pneg %p35
      %p150 = pneg %p32
      %p151 = pneg %p56
      %p152 = pneg %p53
      %p153 = pneg %p77
      %p154 = pneg %p74
      %p155 = pneg %p103
      %p156 = pneg %p100
      %s157 = smul.u32 32, %s14
      %p158 = scmp.lt.s32.totalorder %s157, 63
      %s159 = scalar_select %p158, %s157, 63
      %s160 = smul.addr %s159, 8
      %s161 = scalar_lea.vmem %s3, %s160
      %s162 = smul.u32 32, %s14
      %p163 = scmp.lt.s32.totalorder %s162, 63
      %s164 = scalar_select %p163, %s162, 63
      %s165 = smul.addr %s164, 4
      %s166 = scalar_lea.vmem %s0, %s165
      %s167 = smul.u32 32, %s14
      %s168 = smul.u32 32, %s14
      %p169 = scmp.lt.s32.totalorder %s168, 63
      %s170 = scalar_select %p169, %s168, 63
      %s171 = smul.addr %s170, 8
      %s172 = scalar_lea.vmem %s3, %s171
      %s173 = smul.u32 32, %s14
      %v174 = vld [vmem:[%s166] sm:$0xf]
      %v175 = vld [vmem:[%s166 + $0x4] sm:$0xf]
      %v176 = vld [vmem:[%s166 + $0x8] sm:$0xf]
      %v177 = vld [vmem:[%s166 + $0xc] sm:$0xf]
      %v178 = vld [vmem:[%s166 + $0x10] sm:$0xf]
      %v179 = vld [vmem:[%s166 + $0x14] sm:$0xf]
      %v180 = vld [vmem:[%s166 + $0x18] sm:$0xf]
      %v181 = vld [vmem:[%s166 + $0x1c] sm:$0xf]
      %v182 = vld [vmem:[%s166 + $0x20] sm:$0xf]
      %v183 = vld [vmem:[%s166 + $0x24] sm:$0xf]
      %v184 = vld [vmem:[%s166 + $0x28] sm:$0xf]
      %v185 = vld [vmem:[%s166 + $0x2c] sm:$0xf]
      %v186 = vld [vmem:[%s166 + $0x30] sm:$0xf]
      %v187 = vld [vmem:[%s166 + $0x34] sm:$0xf]
      %v188 = vld [vmem:[%s166 + $0x38] sm:$0xf]
      %v189 = vld [vmem:[%s166 + $0x3c] sm:$0xf]
      %v190 = vld [vmem:[%s166 + $0x40] sm:$0xf]
      %v191 = vld [vmem:[%s166 + $0x44] sm:$0xf]
      %v192 = vld [vmem:[%s166 + $0x48] sm:$0xf]
      %v193 = vld [vmem:[%s166 + $0x4c] sm:$0xf]
      %v194 = vld [vmem:[%s166 + $0x50] sm:$0xf]
      %v195 = vld [vmem:[%s166 + $0x54] sm:$0xf]
      %v196 = vld [vmem:[%s166 + $0x58] sm:$0xf]
      %v197 = vld [vmem:[%s166 + $0x5c] sm:$0xf]
      %v198 = vld [vmem:[%s166 + $0x60] sm:$0xf]
      %v199 = vld [vmem:[%s166 + $0x64] sm:$0xf]
      %v200 = vld [vmem:[%s166 + $0x68] sm:$0xf]
      %v201 = vld [vmem:[%s166 + $0x6c] sm:$0xf]
      %v202 = vld [vmem:[%s166 + $0x70] sm:$0xf]
      %v203 = vld [vmem:[%s166 + $0x74] sm:$0xf]
      %v204 = vld [vmem:[%s166 + $0x78] sm:$0xf]
      %v205 = vld [vmem:[%s166 + $0x7c] sm:$0xf]
      %v206 = vld [vmem:[%s1] sm:$0xf]
      %v207 = vld [vmem:[%s1 + $0x4] sm:$0xf]
      %v208 = vld [vmem:[%s1 + $0x8] sm:$0xf]
      %v209 = vld [vmem:[%s1 + $0xc] sm:$0xf]
      %v210 = vld [vmem:[%s1 + $0x10] sm:$0xf]
      %v211 = vld [vmem:[%s1 + $0x14] sm:$0xf]
      %v212 = vld [vmem:[%s1 + $0x18] sm:$0xf]
      %v213 = vld [vmem:[%s1 + $0x1c] sm:$0xf]
      %v214 = vld [vmem:[%s1 + $0x20] sm:$0xf]
      %v215 = vld [vmem:[%s1 + $0x24] sm:$0xf]
      %v216 = vld [vmem:[%s1 + $0x28] sm:$0xf]
      %v217 = vld [vmem:[%s1 + $0x2c] sm:$0xf]
      %v218 = vld [vmem:[%s1 + $0x30] sm:$0xf]
      %v219 = vld [vmem:[%s1 + $0x34] sm:$0xf]
      %v220 = vld [vmem:[%s1 + $0x38] sm:$0xf]
      %v221 = vld [vmem:[%s1 + $0x3c] sm:$0xf]
      %v222 = vld [vmem:[%s2] sm:$0x1]
      %v224 = vperm.slane %v222, 0
      %v258 = vunpack.c.l.b16 %v174
      %v259 = vunpack.c.l.b16 %v175
      %v260 = vunpack.c.l.b16 %v176
      %v261 = vunpack.c.l.b16 %v177
      %v262 = vunpack.c.l.b16 %v178
      %v263 = vunpack.c.l.b16 %v179
      %v264 = vunpack.c.l.b16 %v180
      %v265 = vunpack.c.l.b16 %v181
      %v266 = vunpack.c.l.b16 %v182
      %v267 = vunpack.c.l.b16 %v183
      %v268 = vunpack.c.l.b16 %v184
      %v269 = vunpack.c.l.b16 %v185
      %v270 = vunpack.c.l.b16 %v186
      %v271 = vunpack.c.l.b16 %v187
      %v272 = vunpack.c.l.b16 %v188
      %v273 = vunpack.c.l.b16 %v189
      %v274 = vunpack.c.l.b16 %v190
      %v275 = vunpack.c.l.b16 %v191
      %v276 = vunpack.c.l.b16 %v192
      %v277 = vunpack.c.l.b16 %v193
      %v278 = vunpack.c.l.b16 %v194
      %v279 = vunpack.c.l.b16 %v195
      %v280 = vunpack.c.l.b16 %v196
      %v281 = vunpack.c.l.b16 %v197
      %v282 = vunpack.c.l.b16 %v198
      %v283 = vunpack.c.l.b16 %v199
      %v284 = vunpack.c.l.b16 %v200
      %v285 = vunpack.c.l.b16 %v201
      %v286 = vunpack.c.l.b16 %v202
      %v287 = vunpack.c.l.b16 %v203
      %v288 = vunpack.c.l.b16 %v204
      %v289 = vunpack.c.l.b16 %v205
      %v290 = vpack.c.b16 %v259, %v258
      %v291 = vpack.c.b16 %v261, %v260
      %v292 = vpack.c.b16 %v263, %v262
      %v293 = vpack.c.b16 %v265, %v264
      %v294 = vpack.c.b16 %v267, %v266
      %v295 = vpack.c.b16 %v269, %v268
      %v296 = vpack.c.b16 %v271, %v270
      %v297 = vpack.c.b16 %v273, %v272
      %v298 = vpack.c.b16 %v275, %v274
      %v299 = vpack.c.b16 %v277, %v276
      %v300 = vpack.c.b16 %v279, %v278
      %v301 = vpack.c.b16 %v281, %v280
      %v302 = vpack.c.b16 %v283, %v282
      %v303 = vpack.c.b16 %v285, %v284
      %v304 = vpack.c.b16 %v287, %v286
      %v305 = vpack.c.b16 %v289, %v288
      %v338 = vunpack.c.l.b16 %v206
      %v339 = vunpack.c.l.b16 %v207
      %v340 = vunpack.c.l.b16 %v208
      %v341 = vunpack.c.l.b16 %v209
      %v342 = vunpack.c.l.b16 %v210
      %v343 = vunpack.c.l.b16 %v211
      %v344 = vunpack.c.l.b16 %v212
      %v345 = vunpack.c.l.b16 %v213
      %v346 = vunpack.c.l.b16 %v214
      %v347 = vunpack.c.l.b16 %v215
      %v348 = vunpack.c.l.b16 %v216
      %v349 = vunpack.c.l.b16 %v217
      %v350 = vunpack.c.l.b16 %v218
      %v351 = vunpack.c.l.b16 %v219
      %v352 = vunpack.c.l.b16 %v220
      %v353 = vunpack.c.l.b16 %v221
      %v354 = vpack.c.b16 %v339, %v338
      %v355 = vpack.c.b16 %v341, %v340
      %v356 = vpack.c.b16 %v343, %v342
      %v357 = vpack.c.b16 %v345, %v344
      %v358 = vpack.c.b16 %v347, %v346
      %v359 = vpack.c.b16 %v349, %v348
      %v360 = vpack.c.b16 %v351, %v350
      %v361 = vpack.c.b16 %v353, %v352
      %370 = vmatpush.bf16.msra.mxu0 %v361
      %371 = vmatpush.bf16.msra.mxu0 %v360
      %372 = vmatpush.bf16.msra.mxu0 %v359
      %373 = vmatpush.bf16.msra.mxu0 %v358
      %374 = vmatpush.bf16.msra.mxu0 %v357
      %375 = vmatpush.bf16.msra.mxu0 %v356
      %376 = vmatpush.bf16.msra.mxu0 %v355
      %377 = vmatpush.bf16.msra.mxu0 %v354
      %378 = vmatmul.bf16.gmra.mxu0 %v290
      %v379 = vpop.f32.mrf.mxu0
      %v380 = vadd.f32 %v224, %v379
      %v381 = vpop.f32.mrf.mxu0
      %v382 = vadd.f32 %v224, %v381
      %383 = vmatmul.bf16.gmra.mxu0 %v291
      %v384 = vpop.f32.mrf.mxu0
      %v385 = vadd.f32 %v224, %v384
      %v386 = vpop.f32.mrf.mxu0
      %v387 = vadd.f32 %v224, %v386
      %388 = vmatmul.bf16.gmra.mxu0 %v292
      %v389 = vpop.f32.mrf.mxu0
      %v390 = vadd.f32 %v224, %v389
      %v391 = vpop.f32.mrf.mxu0
      %v392 = vadd.f32 %v224, %v391
      %393 = vmatmul.bf16.gmra.mxu0 %v293
      %v394 = vpop.f32.mrf.mxu0
      %v395 = vadd.f32 %v224, %v394
      %v396 = vpop.f32.mrf.mxu0
      %v397 = vadd.f32 %v224, %v396
      %398 = vmatmul.bf16.gmra.mxu0 %v294
      %v399 = vpop.f32.mrf.mxu0
      %v400 = vadd.f32 %v224, %v399
      %v401 = vpop.f32.mrf.mxu0
      %v402 = vadd.f32 %v224, %v401
      %403 = vmatmul.bf16.gmra.mxu0 %v295
      %v404 = vpop.f32.mrf.mxu0
      %v405 = vadd.f32 %v224, %v404
      %v406 = vpop.f32.mrf.mxu0
      %v407 = vadd.f32 %v224, %v406
      %408 = vmatmul.bf16.gmra.mxu0 %v296
      %v409 = vpop.f32.mrf.mxu0
      %v410 = vadd.f32 %v224, %v409
      %v411 = vpop.f32.mrf.mxu0
      %v412 = vadd.f32 %v224, %v411
      %413 = vmatmul.bf16.gmra.mxu0 %v297
      %v414 = vpop.f32.mrf.mxu0
      %v415 = vadd.f32 %v224, %v414
      %v416 = vpop.f32.mrf.mxu0
      %v417 = vadd.f32 %v224, %v416
      %418 = vmatmul.bf16.gmra.mxu0 %v298
      %v419 = vpop.f32.mrf.mxu0
      %v420 = vadd.f32 %v224, %v419
      %v421 = vpop.f32.mrf.mxu0
      %v422 = vadd.f32 %v224, %v421
      %423 = vmatmul.bf16.gmra.mxu0 %v299
      %v424 = vpop.f32.mrf.mxu0
      %v425 = vadd.f32 %v224, %v424
      %v426 = vpop.f32.mrf.mxu0
      %v427 = vadd.f32 %v224, %v426
      %428 = vmatmul.bf16.gmra.mxu0 %v300
      %v429 = vpop.f32.mrf.mxu0
      %v430 = vadd.f32 %v224, %v429
      %v431 = vpop.f32.mrf.mxu0
      %v432 = vadd.f32 %v224, %v431
      %433 = vmatmul.bf16.gmra.mxu0 %v301
      %v434 = vpop.f32.mrf.mxu0
      %v435 = vadd.f32 %v224, %v434
      %v436 = vpop.f32.mrf.mxu0
      %v437 = vadd.f32 %v224, %v436
      %438 = vmatmul.bf16.gmra.mxu0 %v302
      %v439 = vpop.f32.mrf.mxu0
      %v440 = vadd.f32 %v224, %v439
      %v441 = vpop.f32.mrf.mxu0
      %v442 = vadd.f32 %v224, %v441
      %443 = vmatmul.bf16.gmra.mxu0 %v303
      %v444 = vpop.f32.mrf.mxu0
      %v445 = vadd.f32 %v224, %v444
      %v446 = vpop.f32.mrf.mxu0
      %v447 = vadd.f32 %v224, %v446
      %448 = vmatmul.bf16.gmra.mxu0 %v304
      %v449 = vpop.f32.mrf.mxu0
      %v450 = vadd.f32 %v224, %v449
      %v451 = vpop.f32.mrf.mxu0
      %v452 = vadd.f32 %v224, %v451
      %453 = vmatmul.bf16.gmra.mxu0 %v305
      %v454 = vpop.f32.mrf.mxu0
      %v455 = vadd.f32 %v224, %v454
      %v456 = vpop.f32.mrf.mxu0
      %v457 = vadd.f32 %v224, %v456
      %458 = vdwg.mxu0
      %v459 = vmax.f32 %v380, 0.0
      %v460 = vmax.f32 %v382, 0.0
      %v461 = vmax.f32 %v385, 0.0
      %v462 = vmax.f32 %v387, 0.0
      %v463 = vmax.f32 %v390, 0.0
      %v464 = vmax.f32 %v392, 0.0
      %v465 = vmax.f32 %v395, 0.0
      %v466 = vmax.f32 %v397, 0.0
      %v467 = vmax.f32 %v400, 0.0
      %v468 = vmax.f32 %v402, 0.0
      %v469 = vmax.f32 %v405, 0.0
      %v470 = vmax.f32 %v407, 0.0
      %v471 = vmax.f32 %v410, 0.0
      %v472 = vmax.f32 %v412, 0.0
      %v473 = vmax.f32 %v415, 0.0
      %v474 = vmax.f32 %v417, 0.0
      %v475 = vmax.f32 %v420, 0.0
      %v476 = vmax.f32 %v422, 0.0
      %v477 = vmax.f32 %v425, 0.0
      %v478 = vmax.f32 %v427, 0.0
      %v479 = vmax.f32 %v430, 0.0
      %v480 = vmax.f32 %v432, 0.0
      %v481 = vmax.f32 %v435, 0.0
      %v482 = vmax.f32 %v437, 0.0
      %v483 = vmax.f32 %v440, 0.0
      %v484 = vmax.f32 %v442, 0.0
      %v485 = vmax.f32 %v445, 0.0
      %v486 = vmax.f32 %v447, 0.0
      %v487 = vmax.f32 %v450, 0.0
      %v488 = vmax.f32 %v452, 0.0
      %v489 = vmax.f32 %v455, 0.0
      %v490 = vmax.f32 %v457, 0.0
      %491 = vst [vmem:[%s172] sm:$0xff] %v459
      %492 = vst [vmem:[%s172 + $0x8] sm:$0xff] %v460
      %493 = vst [vmem:[%s172 + $0x10] sm:$0xff] %v461
      %494 = vst [vmem:[%s172 + $0x18] sm:$0xff] %v462
      %495 = vst [vmem:[%s172 + $0x20] sm:$0xff] %v463
      %496 = vst [vmem:[%s172 + $0x28] sm:$0xff] %v464
      %497 = vst [vmem:[%s172 + $0x30] sm:$0xff] %v465
      %498 = vst [vmem:[%s172 + $0x38] sm:$0xff] %v466
      %499 = vst [vmem:[%s172 + $0x40] sm:$0xff] %v467
      %500 = vst [vmem:[%s172 + $0x48] sm:$0xff] %v468
      %501 = vst [vmem:[%s172 + $0x50] sm:$0xff] %v469
      %502 = vst [vmem:[%s172 + $0x58] sm:$0xff] %v470
      %503 = vst [vmem:[%s172 + $0x60] sm:$0xff] %v471
      %504 = vst [vmem:[%s172 + $0x68] sm:$0xff] %v472
      %505 = vst [vmem:[%s172 + $0x70] sm:$0xff] %v473
      %506 = vst [vmem:[%s172 + $0x78] sm:$0xff] %v474
      %507 = vst [vmem:[%s172 + $0x80] sm:$0xff] %v475
      %508 = vst [vmem:[%s172 + $0x88] sm:$0xff] %v476
      %509 = vst [vmem:[%s172 + $0x90] sm:$0xff] %v477
      %510 = vst [vmem:[%s172 + $0x98] sm:$0xff] %v478
      %511 = vst [vmem:[%s172 + $0xa0] sm:$0xff] %v479
      %512 = vst [vmem:[%s172 + $0xa8] sm:$0xff] %v480
      %513 = vst [vmem:[%s172 + $0xb0] sm:$0xff] %v481
      %514 = vst [vmem:[%s172 + $0xb8] sm:$0xff] %v482
      %515 = vst [vmem:[%s172 + $0xc0] sm:$0xff] %v483
      %516 = vst [vmem:[%s172 + $0xc8] sm:$0xff] %v484
      %517 = vst [vmem:[%s172 + $0xd0] sm:$0xff] %v485
      %518 = vst [vmem:[%s172 + $0xd8] sm:$0xff] %v486
      %519 = vst [vmem:[%s172 + $0xe0] sm:$0xff] %v487
      %520 = vst [vmem:[%s172 + $0xe8] sm:$0xff] %v488
      %521 = vst [vmem:[%s172 + $0xf0] sm:$0xff] %v489
      %522 = vst [vmem:[%s172 + $0xf8] sm:$0xff] %v490
      %s523 = smul.u32 32, %s14
      %p524 = scmp.lt.s32.totalorder %s523, 63
      %s525 = scalar_select %p524, %s523, 63
      %s526 = smul.addr %s525, 8
      %s527 = scalar_lea.vmem %s3, %s526
      // Predicated region
      $region33: #{vqa_forward.8} parent=31 // pred_check
        %p528 = pneg %p100
      $region34: #{vqa_forward.8} parent=31 // pred_check_branch
        %530 = sbr.rel (%p528) target = $region36
      $region35: #{vqa_forward.8} parent=31 // pred_region
        %s531 = smul.u32 32, %s14
      $region36: #{vqa_forward.8} parent=31 // pred_fallthru
        _
    $region32: #{vqa_forward.8} parent=5 // pred_fallthru
      _
    %p532 = scmp.le.s32.totalorder 2, %s9
    // Predicated region
    $region37: #{vqa_forward.8} parent=5 // pred_check
      %p533 = pneg %p532
    $region38: #{vqa_forward.8} parent=5 // pred_check_branch
      %535 = sbr.rel (%p533) target = $region40
    $region39: #{vqa_forward.8} parent=5 // pred_region
      %s536 = ssub.s32 %s9, 2
      // Predicated region
      $region41: #{vqa_forward.8} parent=39 // pred_check
        %p537 = pneg %p106
      $region42: #{vqa_forward.8} parent=39 // pred_check_branch
        %539 = sbr.rel (%p537) target = $region44
      $region43: #{vqa_forward.8} parent=39 // pred_region
        %s540 = smul.u32 32, %s15
        %p541 = scmp.lt.s32.totalorder %s540, 63
        %s542 = scalar_select %p541, %s540, 63
        %s543 = smul.addr %s542, 8
        %s544 = scalar_lea.vmem %s3, %s543
      $region44: #{vqa_forward.8} parent=39 // pred_fallthru
        _
    $region40: #{vqa_forward.8} parent=5 // pred_fallthru
      _
  $region6: #{vqa_forward.8} parent=0 // loop_footer
    %s13 = sadd.s32 1, %s9
  $region7: #{vqa_forward.8} parent=0 // loop_footer_branch
    %8 = sbr.rel target = $region3
  $region8: #{vqa_forward.8} parent=0 // loop_exit
    _

// kernel: vqa_forward.9
$region0: #{vqa_forward.9}
  #allocation0 [shape = 'u32[]', space=smem, size = 0x4, offset = 0x4, fixed_abs, tag = 'smem constant byte address 0x4 - core index']
  #allocation1 [shape = 'u32[72,128]{1,0:T(1,128)}', space=vmem, size = 0x9000, scoped, tag = 'internal scratch']
  %s0 = inlined_call_operand.vmem [shape: bf16[128,128], index: 0, kind: input, shape index: {}]
  %s1 = inlined_call_operand.vmem [shape: bf16[128,128], index: 1, kind: input, shape index: {}]
  %s2 = inlined_call_operand.vmem [shape: f32[1,128], index: 2, kind: input, shape index: {}]
  %s3 = inlined_call_operand.vmem [shape: f32[128,128], index: 3, kind: output, shape index: {}]
  %s4 = sld [smem:[#allocation0]]
  $region22: #{vqa_forward.9} parent=0
    _
  %s6 = ssub.s32 1, %s4
  %s7 = scalar_select 0, %s6, %s4
  // Predicated region
  $region2: #{vqa_forward.9} parent=0 // pred_check
    _
  $region3: #{vqa_forward.9} parent=0 // pred_check_branch
    %9 = sbr.rel (0) target = $region5
  $region4: #{vqa_forward.9} parent=0 // pred_region
    _
  $region5: #{vqa_forward.9} parent=0 // pred_fallthru
    _
  // Predicated region
  $region6: #{vqa_forward.9} parent=0 // pred_check
    _
  $region7: #{vqa_forward.9} parent=0 // pred_check_branch
    %11 = sbr.rel (0) target = $region9
  $region8: #{vqa_forward.9} parent=0 // pred_region
    _
  $region9: #{vqa_forward.9} parent=0 // pred_fallthru
    _
  // Predicated region
  $region10: #{vqa_forward.9} parent=0 // pred_check
    _
  $region11: #{vqa_forward.9} parent=0 // pred_check_branch
    %13 = sbr.rel (0) target = $region13
  $region12: #{vqa_forward.9} parent=0 // pred_region
    _
  $region13: #{vqa_forward.9} parent=0 // pred_fallthru
    _
  %v14 = vld [vmem:[%s0] sm:$0xf]
  %v15 = vld [vmem:[%s0 + $0x4] sm:$0xf]
  %v16 = vld [vmem:[%s0 + $0x8] sm:$0xf]
  %v17 = vld [vmem:[%s0 + $0xc] sm:$0xf]
  %v18 = vld [vmem:[%s0 + $0x10] sm:$0xf]
  %v19 = vld [vmem:[%s0 + $0x14] sm:$0xf]
  %v20 = vld [vmem:[%s0 + $0x18] sm:$0xf]
  %v21 = vld [vmem:[%s0 + $0x1c] sm:$0xf]
  %v22 = vld [vmem:[%s0 + $0x20] sm:$0xf]
  %v23 = vld [vmem:[%s0 + $0x24] sm:$0xf]
  %v24 = vld [vmem:[%s0 + $0x28] sm:$0xf]
  %v25 = vld [vmem:[%s0 + $0x2c] sm:$0xf]
  %v26 = vld [vmem:[%s0 + $0x30] sm:$0xf]
  %v27 = vld [vmem:[%s0 + $0x34] sm:$0xf]
  %v28 = vld [vmem:[%s0 + $0x38] sm:$0xf]
  %v29 = vld [vmem:[%s0 + $0x3c] sm:$0xf]
  %v30 = vld [vmem:[%s1] sm:$0xf]
  %v31 = vld [vmem:[%s1 + $0x4] sm:$0xf]
  %v32 = vld [vmem:[%s1 + $0x8] sm:$0xf]
  %v33 = vld [vmem:[%s1 + $0xc] sm:$0xf]
  %v34 = vld [vmem:[%s1 + $0x10] sm:$0xf]
  %v35 = vld [vmem:[%s1 + $0x14] sm:$0xf]
  %v36 = vld [vmem:[%s1 + $0x18] sm:$0xf]
  %v37 = vld [vmem:[%s1 + $0x1c] sm:$0xf]
  %v38 = vld [vmem:[%s1 + $0x20] sm:$0xf]
  %v39 = vld [vmem:[%s1 + $0x24] sm:$0xf]
  %v40 = vld [vmem:[%s1 + $0x28] sm:$0xf]
  %v41 = vld [vmem:[%s1 + $0x2c] sm:$0xf]
  %v42 = vld [vmem:[%s1 + $0x30] sm:$0xf]
  %v43 = vld [vmem:[%s1 + $0x34] sm:$0xf]
  %v44 = vld [vmem:[%s1 + $0x38] sm:$0xf]
  %v45 = vld [vmem:[%s1 + $0x3c] sm:$0xf]
  %v46 = vld [vmem:[%s2] sm:$0x1]
  %v48 = vperm.slane %v46, 0
  %v66 = vunpack.c.l.b16 %v14
  %v67 = vunpack.c.l.b16 %v15
  %v68 = vunpack.c.l.b16 %v16
  %v69 = vunpack.c.l.b16 %v17
  %v70 = vunpack.c.l.b16 %v18
  %v71 = vunpack.c.l.b16 %v19
  %v72 = vunpack.c.l.b16 %v20
  %v73 = vunpack.c.l.b16 %v21
  %v74 = vunpack.c.l.b16 %v22
  %v75 = vunpack.c.l.b16 %v23
  %v76 = vunpack.c.l.b16 %v24
  %v77 = vunpack.c.l.b16 %v25
  %v78 = vunpack.c.l.b16 %v26
  %v79 = vunpack.c.l.b16 %v27
  %v80 = vunpack.c.l.b16 %v28
  %v81 = vunpack.c.l.b16 %v29
  %v82 = vpack.c.b16 %v67, %v66
  %v83 = vpack.c.b16 %v69, %v68
  %v84 = vpack.c.b16 %v71, %v70
  %v85 = vpack.c.b16 %v73, %v72
  %v86 = vpack.c.b16 %v75, %v74
  %v87 = vpack.c.b16 %v77, %v76
  %v88 = vpack.c.b16 %v79, %v78
  %v89 = vpack.c.b16 %v81, %v80
  %v114 = vunpack.c.l.b16 %v30
  %v115 = vunpack.c.l.b16 %v31
  %v116 = vunpack.c.l.b16 %v32
  %v117 = vunpack.c.l.b16 %v33
  %v118 = vunpack.c.l.b16 %v34
  %v119 = vunpack.c.l.b16 %v35
  %v120 = vunpack.c.l.b16 %v36
  %v121 = vunpack.c.l.b16 %v37
  %v122 = vunpack.c.l.b16 %v38
  %v123 = vunpack.c.l.b16 %v39
  %v124 = vunpack.c.l.b16 %v40
  %v125 = vunpack.c.l.b16 %v41
  %v126 = vunpack.c.l.b16 %v42
  %v127 = vunpack.c.l.b16 %v43
  %v128 = vunpack.c.l.b16 %v44
  %v129 = vunpack.c.l.b16 %v45
  %v130 = vpack.c.b16 %v115, %v114
  %v131 = vpack.c.b16 %v117, %v116
  %v132 = vpack.c.b16 %v119, %v118
  %v133 = vpack.c.b16 %v121, %v120
  %v134 = vpack.c.b16 %v123, %v122
  %v135 = vpack.c.b16 %v125, %v124
  %v136 = vpack.c.b16 %v127, %v126
  %v137 = vpack.c.b16 %v129, %v128
  %146 = vmatpush.bf16.msra.mxu0 %v137
  %147 = vmatpush.bf16.msra.mxu0 %v136
  %148 = vmatpush.bf16.msra.mxu0 %v135
  %149 = vmatpush.bf16.msra.mxu0 %v134
  %150 = vmatpush.bf16.msra.mxu0 %v133
  %151 = vmatpush.bf16.msra.mxu0 %v132
  %152 = vmatpush.bf16.msra.mxu0 %v131
  %153 = vmatpush.bf16.msra.mxu0 %v130
  %154 = vmatmul.bf16.gmra.mxu0 %v82
  %v155 = vpop.f32.mrf.mxu0
  %v156 = vadd.f32 %v48, %v155
  %v157 = vpop.f32.mrf.mxu0
  %v158 = vadd.f32 %v48, %v157
  %159 = vmatmul.bf16.gmra.mxu0 %v83
  %v160 = vpop.f32.mrf.mxu0
  %v161 = vadd.f32 %v48, %v160
  %v162 = vpop.f32.mrf.mxu0
  %v163 = vadd.f32 %v48, %v162
  %164 = vmatmul.bf16.gmra.mxu0 %v84
  %v165 = vpop.f32.mrf.mxu0
  %v166 = vadd.f32 %v48, %v165
  %v167 = vpop.f32.mrf.mxu0
  %v168 = vadd.f32 %v48, %v167
  %169 = vmatmul.bf16.gmra.mxu0 %v85
  %v170 = vpop.f32.mrf.mxu0
  %v171 = vadd.f32 %v48, %v170
  %v172 = vpop.f32.mrf.mxu0
  %v173 = vadd.f32 %v48, %v172
  %174 = vmatmul.bf16.gmra.mxu0 %v86
  %v175 = vpop.f32.mrf.mxu0
  %v176 = vadd.f32 %v48, %v175
  %v177 = vpop.f32.mrf.mxu0
  %v178 = vadd.f32 %v48, %v177
  %179 = vmatmul.bf16.gmra.mxu0 %v87
  %v180 = vpop.f32.mrf.mxu0
  %v181 = vadd.f32 %v48, %v180
  %v182 = vpop.f32.mrf.mxu0
  %v183 = vadd.f32 %v48, %v182
  %184 = vmatmul.bf16.gmra.mxu0 %v88
  %v185 = vpop.f32.mrf.mxu0
  %v186 = vadd.f32 %v48, %v185
  %v187 = vpop.f32.mrf.mxu0
  %v188 = vadd.f32 %v48, %v187
  %189 = vmatmul.bf16.gmra.mxu0 %v89
  %v190 = vpop.f32.mrf.mxu0
  %v191 = vadd.f32 %v48, %v190
  %v192 = vpop.f32.mrf.mxu0
  %v193 = vadd.f32 %v48, %v192
  %194 = vdwg.mxu0
  %v195 = vmax.f32 %v156, 0.0
  %v196 = vmax.f32 %v158, 0.0
  %v197 = vmax.f32 %v161, 0.0
  %v198 = vmax.f32 %v163, 0.0
  %v199 = vmax.f32 %v166, 0.0
  %v200 = vmax.f32 %v168, 0.0
  %v201 = vmax.f32 %v171, 0.0
  %v202 = vmax.f32 %v173, 0.0
  %v203 = vmax.f32 %v176, 0.0
  %v204 = vmax.f32 %v178, 0.0
  %v205 = vmax.f32 %v181, 0.0
  %v206 = vmax.f32 %v183, 0.0
  %v207 = vmax.f32 %v186, 0.0
  %v208 = vmax.f32 %v188, 0.0
  %v209 = vmax.f32 %v191, 0.0
  %v210 = vmax.f32 %v193, 0.0
  %211 = vst [vmem:[%s3] sm:$0xff] %v195
  %212 = vst [vmem:[%s3 + $0x8] sm:$0xff] %v196
  %213 = vst [vmem:[%s3 + $0x10] sm:$0xff] %v197
  %214 = vst [vmem:[%s3 + $0x18] sm:$0xff] %v198
  %215 = vst [vmem:[%s3 + $0x20] sm:$0xff] %v199
  %216 = vst [vmem:[%s3 + $0x28] sm:$0xff] %v200
  %217 = vst [vmem:[%s3 + $0x30] sm:$0xff] %v201
  %218 = vst [vmem:[%s3 + $0x38] sm:$0xff] %v202
  %219 = vst [vmem:[%s3 + $0x40] sm:$0xff] %v203
  %220 = vst [vmem:[%s3 + $0x48] sm:$0xff] %v204
  %221 = vst [vmem:[%s3 + $0x50] sm:$0xff] %v205
  %222 = vst [vmem:[%s3 + $0x58] sm:$0xff] %v206
  %223 = vst [vmem:[%s3 + $0x60] sm:$0xff] %v207
  %224 = vst [vmem:[%s3 + $0x68] sm:$0xff] %v208
  %225 = vst [vmem:[%s3 + $0x70] sm:$0xff] %v209
  %226 = vst [vmem:[%s3 + $0x78] sm:$0xff] %v210
  // Predicated region
  $region14: #{vqa_forward.9} parent=0 // pred_check
    _
  $region15: #{vqa_forward.9} parent=0 // pred_check_branch
    %228 = sbr.rel (0) target = $region17
  $region16: #{vqa_forward.9} parent=0 // pred_region
    _
  $region17: #{vqa_forward.9} parent=0 // pred_fallthru
    _
  // Predicated region
  $region18: #{vqa_forward.9} parent=0 // pred_check
    _
  $region19: #{vqa_forward.9} parent=0 // pred_check_branch
    %230 = sbr.rel (0) target = $region21
  $region20: #{vqa_forward.9} parent=0 // pred_region
    _
  $region21: #{vqa_forward.9} parent=0 // pred_fallthru
    _

// kernel: vqa_forward.10
$region0: #{vqa_forward.10}
  #allocation0 [shape = 'u32[]', space=smem, size = 0x4, offset = 0x4, fixed_abs, tag = 'smem constant byte address 0x4 - core index']
  #allocation1 [shape = 'u32[72,128]{1,0:T(1,128)}', space=vmem, size = 0x9000, scoped, tag = 'internal scratch']
  %s0 = inlined_call_operand.vmem [shape: bf16[2,256], index: 0, kind: input, shape index: {}]
  %s1 = inlined_call_operand.vmem [shape: bf16[256,128], index: 1, kind: input, shape index: {}]
  %s2 = inlined_call_operand.vmem [shape: f32[1,128], index: 2, kind: input, shape index: {}]
  %s3 = inlined_call_operand.vmem [shape: bf16[128,128], index: 3, kind: input, shape index: {}]
  %s4 = inlined_call_operand.vmem [shape: f32[1,128], index: 4, kind: input, shape index: {}]
  %s5 = inlined_call_operand.vmem [shape: bf16[128,128], index: 5, kind: input, shape index: {}]
  %s6 = inlined_call_operand.vmem [shape: f32[1,128], index: 6, kind: input, shape index: {}]
  %s7 = inlined_call_operand.vmem [shape: f32[2,128], index: 7, kind: output, shape index: {}]
  %s8 = sld [smem:[#allocation0]]
  $region38: #{vqa_forward.10} parent=0
    _
  %s10 = ssub.s32 1, %s8
  %s11 = scalar_select 0, %s10, %s8
  // Predicated region
  $region2: #{vqa_forward.10} parent=0 // pred_check
    _
  $region3: #{vqa_forward.10} parent=0 // pred_check_branch
    %13 = sbr.rel (0) target = $region5
  $region4: #{vqa_forward.10} parent=0 // pred_region
    _
  $region5: #{vqa_forward.10} parent=0 // pred_fallthru
    _
  // Predicated region
  $region6: #{vqa_forward.10} parent=0 // pred_check
    _
  $region7: #{vqa_forward.10} parent=0 // pred_check_branch
    %15 = sbr.rel (0) target = $region9
  $region8: #{vqa_forward.10} parent=0 // pred_region
    _
  $region9: #{vqa_forward.10} parent=0 // pred_fallthru
    _
  // Predicated region
  $region10: #{vqa_forward.10} parent=0 // pred_check
    _
  $region11: #{vqa_forward.10} parent=0 // pred_check_branch
    %17 = sbr.rel (0) target = $region13
  $region12: #{vqa_forward.10} parent=0 // pred_region
    _
  $region13: #{vqa_forward.10} parent=0 // pred_fallthru
    _
  // Predicated region
  $region14: #{vqa_forward.10} parent=0 // pred_check
    _
  $region15: #{vqa_forward.10} parent=0 // pred_check_branch
    %19 = sbr.rel (0) target = $region17
  $region16: #{vqa_forward.10} parent=0 // pred_region
    _
  $region17: #{vqa_forward.10} parent=0 // pred_fallthru
    _
  // Predicated region
  $region18: #{vqa_forward.10} parent=0 // pred_check
    _
  $region19: #{vqa_forward.10} parent=0 // pred_check_branch
    %21 = sbr.rel (0) target = $region21
  $region20: #{vqa_forward.10} parent=0 // pred_region
    _
  $region21: #{vqa_forward.10} parent=0 // pred_fallthru
    _
  // Predicated region
  $region22: #{vqa_forward.10} parent=0 // pred_check
    _
  $region23: #{vqa_forward.10} parent=0 // pred_check_branch
    %23 = sbr.rel (0) target = $region25
  $region24: #{vqa_forward.10} parent=0 // pred_region
    _
  $region25: #{vqa_forward.10} parent=0 // pred_fallthru
    _
  // Predicated region
  $region26: #{vqa_forward.10} parent=0 // pred_check
    _
  $region27: #{vqa_forward.10} parent=0 // pred_check_branch
    %25 = sbr.rel (0) target = $region29
  $region28: #{vqa_forward.10} parent=0 // pred_region
    _
  $region29: #{vqa_forward.10} parent=0 // pred_fallthru
    _
  %v26 = vld [vmem:[%s0] sm:$0x3]
  %v27 = vld [vmem:[%s1] sm:$0xf]
  %v28 = vld [vmem:[%s1 + $0x4] sm:$0xf]
  %v29 = vld [vmem:[%s1 + $0x8] sm:$0xf]
  %v30 = vld [vmem:[%s1 + $0xc] sm:$0xf]
  %v31 = vld [vmem:[%s1 + $0x10] sm:$0xf]
  %v32 = vld [vmem:[%s1 + $0x14] sm:$0xf]
  %v33 = vld [vmem:[%s1 + $0x18] sm:$0xf]
  %v34 = vld [vmem:[%s1 + $0x1c] sm:$0xf]
  %v35 = vld [vmem:[%s1 + $0x20] sm:$0xf]
  %v36 = vld [vmem:[%s1 + $0x24] sm:$0xf]
  %v37 = vld [vmem:[%s1 + $0x28] sm:$0xf]
  %v38 = vld [vmem:[%s1 + $0x2c] sm:$0xf]
  %v39 = vld [vmem:[%s1 + $0x30] sm:$0xf]
  %v40 = vld [vmem:[%s1 + $0x34] sm:$0xf]
  %v41 = vld [vmem:[%s1 + $0x38] sm:$0xf]
  %v42 = vld [vmem:[%s1 + $0x3c] sm:$0xf]
  %v43 = vld [vmem:[%s1 + $0x40] sm:$0xf]
  %v44 = vld [vmem:[%s1 + $0x44] sm:$0xf]
  %v45 = vld [vmem:[%s1 + $0x48] sm:$0xf]
  %v46 = vld [vmem:[%s1 + $0x4c] sm:$0xf]
  %v47 = vld [vmem:[%s1 + $0x50] sm:$0xf]
  %v48 = vld [vmem:[%s1 + $0x54] sm:$0xf]
  %v49 = vld [vmem:[%s1 + $0x58] sm:$0xf]
  %v50 = vld [vmem:[%s1 + $0x5c] sm:$0xf]
  %v51 = vld [vmem:[%s1 + $0x60] sm:$0xf]
  %v52 = vld [vmem:[%s1 + $0x64] sm:$0xf]
  %v53 = vld [vmem:[%s1 + $0x68] sm:$0xf]
  %v54 = vld [vmem:[%s1 + $0x6c] sm:$0xf]
  %v55 = vld [vmem:[%s1 + $0x70] sm:$0xf]
  %v56 = vld [vmem:[%s1 + $0x74] sm:$0xf]
  %v57 = vld [vmem:[%s1 + $0x78] sm:$0xf]
  %v58 = vld [vmem:[%s1 + $0x7c] sm:$0xf]
  %v59 = vld [vmem:[%s2] sm:$0x1]
  %v61 = vperm.slane %v59, 0
  %64 = vst [vmem:[#allocation1] ss:$9 sm:$0xff] %v26
  %v65 = vld [vmem:[#allocation1] sm:$0xff]
  %v66 = vld [vmem:[#allocation1 + $0x9] sm:$0xff]
  %v101 = vunpack.c.l.b16 %v27
  %v102 = vunpack.c.l.b16 %v28
  %v103 = vunpack.c.l.b16 %v29
  %v104 = vunpack.c.l.b16 %v30
  %v105 = vunpack.c.l.b16 %v31
  %v106 = vunpack.c.l.b16 %v32
  %v107 = vunpack.c.l.b16 %v33
  %v108 = vunpack.c.l.b16 %v34
  %v109 = vunpack.c.l.b16 %v35
  %v110 = vunpack.c.l.b16 %v36
  %v111 = vunpack.c.l.b16 %v37
  %v112 = vunpack.c.l.b16 %v38
  %v113 = vunpack.c.l.b16 %v39
  %v114 = vunpack.c.l.b16 %v40
  %v115 = vunpack.c.l.b16 %v41
  %v116 = vunpack.c.l.b16 %v42
  %v117 = vunpack.c.l.b16 %v43
  %v118 = vunpack.c.l.b16 %v44
  %v119 = vunpack.c.l.b16 %v45
  %v120 = vunpack.c.l.b16 %v46
  %v121 = vunpack.c.l.b16 %v47
  %v122 = vunpack.c.l.b16 %v48
  %v123 = vunpack.c.l.b16 %v49
  %v124 = vunpack.c.l.b16 %v50
  %v125 = vunpack.c.l.b16 %v51
  %v126 = vunpack.c.l.b16 %v52
  %v127 = vunpack.c.l.b16 %v53
  %v128 = vunpack.c.l.b16 %v54
  %v129 = vunpack.c.l.b16 %v55
  %v130 = vunpack.c.l.b16 %v56
  %v131 = vunpack.c.l.b16 %v57
  %v132 = vunpack.c.l.b16 %v58
  %v133 = vpack.c.b16 %v102, %v101
  %v134 = vpack.c.b16 %v104, %v103
  %v135 = vpack.c.b16 %v106, %v105
  %v136 = vpack.c.b16 %v108, %v107
  %v137 = vpack.c.b16 %v110, %v109
  %v138 = vpack.c.b16 %v112, %v111
  %v139 = vpack.c.b16 %v114, %v113
  %v140 = vpack.c.b16 %v116, %v115
  %v141 = vpack.c.b16 %v118, %v117
  %v142 = vpack.c.b16 %v120, %v119
  %v143 = vpack.c.b16 %v122, %v121
  %v144 = vpack.c.b16 %v124, %v123
  %v145 = vpack.c.b16 %v126, %v125
  %v146 = vpack.c.b16 %v128, %v127
  %v147 = vpack.c.b16 %v130, %v129
  %v148 = vpack.c.b16 %v132, %v131
  %165 = vmatpush.bf16.msra.mxu0 %v140
  %166 = vmatpush.bf16.msra.mxu0 %v139
  %167 = vmatpush.bf16.msra.mxu0 %v138
  %168 = vmatpush.bf16.msra.mxu0 %v137
  %169 = vmatpush.bf16.msra.mxu0 %v136
  %170 = vmatpush.bf16.msra.mxu0 %v135
  %171 = vmatpush.bf16.msra.mxu0 %v134
  %172 = vmatpush.bf16.msra.mxu0 %v133
  %173 = vmatmul.bf16.gmra.mxu0 %v65
  %v174 = vpop.f32.mrf.mxu0
  %v175 = vadd.f32 %v61, %v174
  %v176 = vpop.f32.mrf.mxu0
  %177 = vdwg.mxu0
  %178 = vmatpush.bf16.msra.mxu0 %v148
  %179 = vmatpush.bf16.msra.mxu0 %v147
  %180 = vmatpush.bf16.msra.mxu0 %v146
  %181 = vmatpush.bf16.msra.mxu0 %v145
  %182 = vmatpush.bf16.msra.mxu0 %v144
  %183 = vmatpush.bf16.msra.mxu0 %v143
  %184 = vmatpush.bf16.msra.mxu0 %v142
  %185 = vmatpush.bf16.msra.mxu0 %v141
  %186 = vmatmul.bf16.gmra.mxu0 %v66
  %v187 = vpop.f32.mrf.mxu0
  %v188 = vadd.f32 %v175, %v187
  %v189 = vpop.f32.mrf.mxu0
  %190 = vdwg.mxu0
  %v191 = vmax.f32 %v188, 0.0
  %v192 = vpack.c.bf16 %v191, %v191
  %v193 = vld [vmem:[%s3] sm:$0xf]
  %v194 = vld [vmem:[%s3 + $0x4] sm:$0xf]
  %v195 = vld [vmem:[%s3 + $0x8] sm:$0xf]
  %v196 = vld [vmem:[%s3 + $0xc] sm:$0xf]
  %v197 = vld [vmem:[%s3 + $0x10] sm:$0xf]
  %v198 = vld [vmem:[%s3 + $0x14] sm:$0xf]
  %v199 = vld [vmem:[%s3 + $0x18] sm:$0xf]
  %v200 = vld [vmem:[%s3 + $0x1c] sm:$0xf]
  %v201 = vld [vmem:[%s3 + $0x20] sm:$0xf]
  %v202 = vld [vmem:[%s3 + $0x24] sm:$0xf]
  %v203 = vld [vmem:[%s3 + $0x28] sm:$0xf]
  %v204 = vld [vmem:[%s3 + $0x2c] sm:$0xf]
  %v205 = vld [vmem:[%s3 + $0x30] sm:$0xf]
  %v206 = vld [vmem:[%s3 + $0x34] sm:$0xf]
  %v207 = vld [vmem:[%s3 + $0x38] sm:$0xf]
  %v208 = vld [vmem:[%s3 + $0x3c] sm:$0xf]
  %v209 = vld [vmem:[%s4] sm:$0x1]
  %v211 = vperm.slane %v209, 0
  %v229 = vunpack.c.l.b16 %v193
  %v230 = vunpack.c.l.b16 %v194
  %v231 = vunpack.c.l.b16 %v195
  %v232 = vunpack.c.l.b16 %v196
  %v233 = vunpack.c.l.b16 %v197
  %v234 = vunpack.c.l.b16 %v198
  %v235 = vunpack.c.l.b16 %v199
  %v236 = vunpack.c.l.b16 %v200
  %v237 = vunpack.c.l.b16 %v201
  %v238 = vunpack.c.l.b16 %v202
  %v239 = vunpack.c.l.b16 %v203
  %v240 = vunpack.c.l.b16 %v204
  %v241 = vunpack.c.l.b16 %v205
  %v242 = vunpack.c.l.b16 %v206
  %v243 = vunpack.c.l.b16 %v207
  %v244 = vunpack.c.l.b16 %v208
  %v245 = vpack.c.b16 %v230, %v229
  %v246 = vpack.c.b16 %v232, %v231
  %v247 = vpack.c.b16 %v234, %v233
  %v248 = vpack.c.b16 %v236, %v235
  %v249 = vpack.c.b16 %v238, %v237
  %v250 = vpack.c.b16 %v240, %v239
  %v251 = vpack.c.b16 %v242, %v241
  %v252 = vpack.c.b16 %v244, %v243
  %261 = vmatpush.bf16.msra.mxu0 %v252
  %262 = vmatpush.bf16.msra.mxu0 %v251
  %263 = vmatpush.bf16.msra.mxu0 %v250
  %264 = vmatpush.bf16.msra.mxu0 %v249
  %265 = vmatpush.bf16.msra.mxu0 %v248
  %266 = vmatpush.bf16.msra.mxu0 %v247
  %267 = vmatpush.bf16.msra.mxu0 %v246
  %268 = vmatpush.bf16.msra.mxu0 %v245
  %269 = vmatmul.bf16.gmra.mxu0 %v192
  %v270 = vpop.f32.mrf.mxu0
  %v271 = vadd.f32 %v211, %v270
  %v272 = vpop.f32.mrf.mxu0
  %273 = vdwg.mxu0
  %v274 = vmax.f32 %v271, 0.0
  %v275 = vpack.c.bf16 %v274, %v274
  %v276 = vld [vmem:[%s5] sm:$0xf]
  %v277 = vld [vmem:[%s5 + $0x4] sm:$0xf]
  %v278 = vld [vmem:[%s5 + $0x8] sm:$0xf]
  %v279 = vld [vmem:[%s5 + $0xc] sm:$0xf]
  %v280 = vld [vmem:[%s5 + $0x10] sm:$0xf]
  %v281 = vld [vmem:[%s5 + $0x14] sm:$0xf]
  %v282 = vld [vmem:[%s5 + $0x18] sm:$0xf]
  %v283 = vld [vmem:[%s5 + $0x1c] sm:$0xf]
  %v284 = vld [vmem:[%s5 + $0x20] sm:$0xf]
  %v285 = vld [vmem:[%s5 + $0x24] sm:$0xf]
  %v286 = vld [vmem:[%s5 + $0x28] sm:$0xf]
  %v287 = vld [vmem:[%s5 + $0x2c] sm:$0xf]
  %v288 = vld [vmem:[%s5 + $0x30] sm:$0xf]
  %v289 = vld [vmem:[%s5 + $0x34] sm:$0xf]
  %v290 = vld [vmem:[%s5 + $0x38] sm:$0xf]
  %v291 = vld [vmem:[%s5 + $0x3c] sm:$0xf]
  %v292 = vld [vmem:[%s6] sm:$0x1]
  %v294 = vperm.slane %v292, 0
  %v312 = vunpack.c.l.b16 %v276
  %v313 = vunpack.c.l.b16 %v277
  %v314 = vunpack.c.l.b16 %v278
  %v315 = vunpack.c.l.b16 %v279
  %v316 = vunpack.c.l.b16 %v280
  %v317 = vunpack.c.l.b16 %v281
  %v318 = vunpack.c.l.b16 %v282
  %v319 = vunpack.c.l.b16 %v283
  %v320 = vunpack.c.l.b16 %v284
  %v321 = vunpack.c.l.b16 %v285
  %v322 = vunpack.c.l.b16 %v286
  %v323 = vunpack.c.l.b16 %v287
  %v324 = vunpack.c.l.b16 %v288
  %v325 = vunpack.c.l.b16 %v289
  %v326 = vunpack.c.l.b16 %v290
  %v327 = vunpack.c.l.b16 %v291
  %v328 = vpack.c.b16 %v313, %v312
  %v329 = vpack.c.b16 %v315, %v314
  %v330 = vpack.c.b16 %v317, %v316
  %v331 = vpack.c.b16 %v319, %v318
  %v332 = vpack.c.b16 %v321, %v320
  %v333 = vpack.c.b16 %v323, %v322
  %v334 = vpack.c.b16 %v325, %v324
  %v335 = vpack.c.b16 %v327, %v326
  %344 = vmatpush.bf16.msra.mxu0 %v335
  %345 = vmatpush.bf16.msra.mxu0 %v334
  %346 = vmatpush.bf16.msra.mxu0 %v333
  %347 = vmatpush.bf16.msra.mxu0 %v332
  %348 = vmatpush.bf16.msra.mxu0 %v331
  %349 = vmatpush.bf16.msra.mxu0 %v330
  %350 = vmatpush.bf16.msra.mxu0 %v329
  %351 = vmatpush.bf16.msra.mxu0 %v328
  %352 = vmatmul.bf16.gmra.mxu0 %v275
  %v353 = vpop.f32.mrf.mxu0
  %v354 = vadd.f32 %v294, %v353
  %v355 = vpop.f32.mrf.mxu0
  %356 = vdwg.mxu0
  %v357 = vmul.f32 %v354, %v354
  %vm358 = vcmask 1041408
  %v359 = vsel %vm358, %v357, 0.0
  %360 = vadd.xlane.f32.xlu0 %v359
  %v361 = vpop.xlane.xlu0 %360
  %v362 = vadd.f32 %v361, 1e-12
  %v363 = vrsqrt.pop %v362
  %v364 = vmul.f32 %v363, %v362
  %v365 = vmul.f32 %v364, %v363
  %v366 = vmul.f32 0.5, %v365
  %v367 = vsub.f32 1.5, %v366
  %v368 = vmul.f32 %v363, %v367
  %vm369 = vweird.f32 %v362
  %vm370 = vweird.f32 %v363
  %vm371 = vmor %vm369, %vm370
  %v372 = vsel %vm371, %v363, %v368
  %v373 = vmul.f32 %v354, %v372
  %374 = vst [vmem:[%s7] sm:$0x3] %v373
  // Predicated region
  $region30: #{vqa_forward.10} parent=0 // pred_check
    _
  $region31: #{vqa_forward.10} parent=0 // pred_check_branch
    %376 = sbr.rel (0) target = $region33
  $region32: #{vqa_forward.10} parent=0 // pred_region
    _
  $region33: #{vqa_forward.10} parent=0 // pred_fallthru
    _
  // Predicated region
  $region34: #{vqa_forward.10} parent=0 // pred_check
    _
  $region35: #{vqa_forward.10} parent=0 // pred_check_branch
    %378 = sbr.rel (0) target = $region37
  $region36: #{vqa_forward.10} parent=0 // pred_region
    _
  $region37: #{vqa_forward.10} parent=0 // pred_fallthru
    _

// kernel: vqa_forward.11
$region0: #{vqa_forward.11}
  #allocation0 [shape = 'u32[]', space=smem, size = 0x4, offset = 0x4, fixed_abs, tag = 'smem constant byte address 0x4 - core index']
  #allocation1 [shape = 'u32[72,128]{1,0:T(1,128)}', space=vmem, size = 0x9000, scoped, tag = 'internal scratch']
  %s0 = inlined_call_operand.vmem [shape: f32[16,32], index: 0, kind: input, shape index: {}]
  %s1 = inlined_call_operand.vmem [shape: bf16[32,128], index: 1, kind: input, shape index: {}]
  %s2 = inlined_call_operand.vmem [shape: f32[1,128], index: 2, kind: input, shape index: {}]
  %s3 = inlined_call_operand.vmem [shape: f32[16,128], index: 3, kind: output, shape index: {}]
  %s4 = sld [smem:[#allocation0]]
  $region22: #{vqa_forward.11} parent=0
    _
  %s6 = ssub.s32 1, %s4
  %s7 = scalar_select 0, %s6, %s4
  // Predicated region
  $region2: #{vqa_forward.11} parent=0 // pred_check
    _
  $region3: #{vqa_forward.11} parent=0 // pred_check_branch
    %9 = sbr.rel (0) target = $region5
  $region4: #{vqa_forward.11} parent=0 // pred_region
    _
  $region5: #{vqa_forward.11} parent=0 // pred_fallthru
    _
  // Predicated region
  $region6: #{vqa_forward.11} parent=0 // pred_check
    _
  $region7: #{vqa_forward.11} parent=0 // pred_check_branch
    %11 = sbr.rel (0) target = $region9
  $region8: #{vqa_forward.11} parent=0 // pred_region
    _
  $region9: #{vqa_forward.11} parent=0 // pred_fallthru
    _
  // Predicated region
  $region10: #{vqa_forward.11} parent=0 // pred_check
    _
  $region11: #{vqa_forward.11} parent=0 // pred_check_branch
    %13 = sbr.rel (0) target = $region13
  $region12: #{vqa_forward.11} parent=0 // pred_region
    _
  $region13: #{vqa_forward.11} parent=0 // pred_fallthru
    _
  %v15 = vld [vmem:[%s0] sm:$0xff]
  %v16 = vld [vmem:[%s0 + $0x8] sm:$0xff]
  %v17 = vtanh.pop %v15
  %v18 = vtanh.pop %v16
  %v19 = vpack.c.bf16 %v18, %v17
  %v20 = vld [vmem:[%s1] sm:$0xf]
  %v21 = vld [vmem:[%s1 + $0x4] sm:$0xf]
  %v22 = vld [vmem:[%s1 + $0x8] sm:$0xf]
  %v23 = vld [vmem:[%s1 + $0xc] sm:$0xf]
  %v24 = vld [vmem:[%s2] sm:$0x1]
  %v26 = vperm.slane %v24, 0
  %v32 = vunpack.c.l.b16 %v20
  %v33 = vunpack.c.l.b16 %v21
  %v34 = vunpack.c.l.b16 %v22
  %v35 = vunpack.c.l.b16 %v23
  %v36 = vpack.c.b16 %v33, %v32
  %v37 = vpack.c.b16 %v35, %v34
  %vm40 = vcmask 261120
  %v42 = vsel %vm40, %v19, 0
  %44 = vmatpush.bf16.msra.mxu0 0
  %45 = vmatpush.bf16.msra.mxu0 0
  %46 = vmatpush.bf16.msra.mxu0 0
  %47 = vmatpush.bf16.msra.mxu0 0
  %48 = vmatpush.bf16.msra.mxu0 0
  %49 = vmatpush.bf16.msra.mxu0 0
  %50 = vmatpush.bf16.msra.mxu0 %v37
  %51 = vmatpush.bf16.msra.mxu0 %v36
  %52 = vmatmul.bf16.gmra.mxu0 %v42
  %v53 = vpop.f32.mrf.mxu0
  %v54 = vadd.f32 %v26, %v53
  %v55 = vpop.f32.mrf.mxu0
  %v56 = vadd.f32 %v26, %v55
  %57 = vdwg.mxu0
  %58 = vst [vmem:[%s3] sm:$0xff] %v54
  %59 = vst [vmem:[%s3 + $0x8] sm:$0xff] %v56
  // Predicated region
  $region14: #{vqa_forward.11} parent=0 // pred_check
    _
  $region15: #{vqa_forward.11} parent=0 // pred_check_branch
    %61 = sbr.rel (0) target = $region17
  $region16: #{vqa_forward.11} parent=0 // pred_region
    _
  $region17: #{vqa_forward.11} parent=0 // pred_fallthru
    _
  // Predicated region
  $region18: #{vqa_forward.11} parent=0 // pred_check
    _
  $region19: #{vqa_forward.11} parent=0 // pred_check_branch
    %63 = sbr.rel (0) target = $region21
  $region20: #{vqa_forward.11} parent=0 // pred_region
    _
  $region21: #{vqa_forward.11} parent=0 // pred_fallthru
    _

// kernel: vqa_forward.13
$region0: #{vqa_forward.13}
  #allocation0 [shape = 'u32[]', space=smem, size = 0x4, offset = 0x4, fixed_abs, tag = 'smem constant byte address 0x4 - core index']
  #allocation1 [shape = 'u32[72,128]{1,0:T(1,128)}', space=vmem, size = 0x9000, scoped, tag = 'internal scratch']
  %s0 = inlined_call_operand.vmem [shape: f32[16,32], index: 0, kind: input, shape index: {}]
  %s1 = inlined_call_operand.vmem [shape: bf16[32,128], index: 1, kind: input, shape index: {}]
  %s2 = inlined_call_operand.vmem [shape: f32[1,128], index: 2, kind: input, shape index: {}]
  %s3 = inlined_call_operand.vmem [shape: f32[16,128], index: 3, kind: output, shape index: {}]
  %s4 = sld [smem:[#allocation0]]
  $region22: #{vqa_forward.13} parent=0
    _
  %s6 = ssub.s32 1, %s4
  %s7 = scalar_select 0, %s6, %s4
  // Predicated region
  $region2: #{vqa_forward.13} parent=0 // pred_check
    _
  $region3: #{vqa_forward.13} parent=0 // pred_check_branch
    %9 = sbr.rel (0) target = $region5
  $region4: #{vqa_forward.13} parent=0 // pred_region
    _
  $region5: #{vqa_forward.13} parent=0 // pred_fallthru
    _
  // Predicated region
  $region6: #{vqa_forward.13} parent=0 // pred_check
    _
  $region7: #{vqa_forward.13} parent=0 // pred_check_branch
    %11 = sbr.rel (0) target = $region9
  $region8: #{vqa_forward.13} parent=0 // pred_region
    _
  $region9: #{vqa_forward.13} parent=0 // pred_fallthru
    _
  // Predicated region
  $region10: #{vqa_forward.13} parent=0 // pred_check
    _
  $region11: #{vqa_forward.13} parent=0 // pred_check_branch
    %13 = sbr.rel (0) target = $region13
  $region12: #{vqa_forward.13} parent=0 // pred_region
    _
  $region13: #{vqa_forward.13} parent=0 // pred_fallthru
    _
  %v15 = vld [vmem:[%s0] sm:$0xff]
  %v16 = vld [vmem:[%s0 + $0x8] sm:$0xff]
  %v17 = vpack.c.bf16 %v16, %v15
  %v18 = vld [vmem:[%s1] sm:$0xf]
  %v19 = vld [vmem:[%s1 + $0x4] sm:$0xf]
  %v20 = vld [vmem:[%s1 + $0x8] sm:$0xf]
  %v21 = vld [vmem:[%s1 + $0xc] sm:$0xf]
  %v22 = vld [vmem:[%s2] sm:$0x1]
  %v24 = vperm.slane %v22, 0
  %v30 = vunpack.c.l.b16 %v18
  %v31 = vunpack.c.l.b16 %v19
  %v32 = vunpack.c.l.b16 %v20
  %v33 = vunpack.c.l.b16 %v21
  %v34 = vpack.c.b16 %v31, %v30
  %v35 = vpack.c.b16 %v33, %v32
  %vm38 = vcmask 261120
  %v40 = vsel %vm38, %v17, 0
  %42 = vmatpush.bf16.msra.mxu0 0
  %43 = vmatpush.bf16.msra.mxu0 0
  %44 = vmatpush.bf16.msra.mxu0 0
  %45 = vmatpush.bf16.msra.mxu0 0
  %46 = vmatpush.bf16.msra.mxu0 0
  %47 = vmatpush.bf16.msra.mxu0 0
  %48 = vmatpush.bf16.msra.mxu0 %v35
  %49 = vmatpush.bf16.msra.mxu0 %v34
  %50 = vmatmul.bf16.gmra.mxu0 %v40
  %v51 = vpop.f32.mrf.mxu0
  %v52 = vadd.f32 %v24, %v51
  %v53 = vpop.f32.mrf.mxu0
  %v54 = vadd.f32 %v24, %v53
  %55 = vdwg.mxu0
  %56 = vst [vmem:[%s3] sm:$0xff] %v52
  %57 = vst [vmem:[%s3 + $0x8] sm:$0xff] %v54
  // Predicated region
  $region14: #{vqa_forward.13} parent=0 // pred_check
    _
  $region15: #{vqa_forward.13} parent=0 // pred_check_branch
    %59 = sbr.rel (0) target = $region17
  $region16: #{vqa_forward.13} parent=0 // pred_region
    _
  $region17: #{vqa_forward.13} parent=0 // pred_fallthru
    _
  // Predicated region
  $region18: #{vqa_forward.13} parent=0 // pred_check
    _
  $region19: #{vqa_forward.13} parent=0 // pred_check_branch
    %61 = sbr.rel (0) target = $region21
  $region20: #{vqa_forward.13} parent=0 // pred_region
    _
  $region21: #{vqa_forward.13} parent=0 // pred_fallthru
    _

// kernel: vqa_forward.12
$region0: #{vqa_forward.12}
  #allocation0 [shape = 'u32[]', space=smem, size = 0x4, offset = 0x4, fixed_abs, tag = 'smem constant byte address 0x4 - core index']
  #allocation1 [shape = 'u32[72,128]{1,0:T(1,128)}', space=vmem, size = 0x9000, scoped, tag = 'internal scratch']
  #allocation2 [shape = 'f32[2,32]{1,0:T(2,128)}', space=vmem, size = 0x400, scoped, tag = 'scratch operand']
  #allocation3 [shape = 'f32[2,32]{1,0:T(2,128)}', space=vmem, size = 0x400, scoped, tag = 'scratch operand']
  %s0 = inlined_call_operand.vmem [shape: f32[8,2,128], index: 0, kind: input, shape index: {}]
  %s1 = inlined_call_operand.vmem [shape: bf16[32,128], index: 1, kind: input, shape index: {}]
  %s2 = inlined_call_operand.vmem [shape: f32[8,2,32], index: 2, kind: output, shape index: {0}]
  %s3 = inlined_call_operand.vmem [shape: f32[2,32], index: 3, kind: output, shape index: {1}]
  %4 = xla_tuple %s2, %s3
  %s5 = sld [smem:[#allocation0]]
  $region53: #{vqa_forward.12} parent=0
    _
  %s7 = ssub.s32 1, %s5
  %s8 = scalar_select 0, %s7, %s5
  loop: start=0, step=1, limit=10
  $region2: #{vqa_forward.12} parent=0 // loop_pre_header
    _
  $region3: #{vqa_forward.12} parent=0 // loop_header
    %s10 = sphi 0, %s14
    %p11 = scmp.ge.s32.totalorder %s10, 10
    %s20 = sphi 0, %s22
    %s23 = sphi 0, %s20
    %s24 = sphi 0, %s23
    %s40 = sphi 0, %s24
    %s44 = sphi 0, %s44
    %s46 = sphi 0, %s44
    %s47 = sphi 0, %s46
    %s61 = sphi 0, %s47
    %s67 = sphi 0, %s69
    %s70 = sphi 0, %s67
    %s71 = sphi 0, %s70
    %s87 = sphi 0, %s71
    %s91 = sphi 0, %s91
    %s93 = sphi 0, %s91
    %s94 = sphi 0, %s93
    %s108 = sphi 0, %s94
  $region4: #{vqa_forward.12} parent=0 // loop_header_branch
    %13 = sbr.rel (%p11) target = $region8
  $region5: #{vqa_forward.12} parent=0 // loop_body
    %s15 = ssub.s32 %s10, 1
    %s16 = ssub.s32 %s10, 2
    %s17 = sadd.s32 %s10, 1
    %s18 = ssub.s32 %s10, %s17
    %p19 = scmp.eq.s32.totalorder %s18, 0
    %s21 = sadd.s32 %s20, 1
    %s22 = scalar_select %p19, %s20, %s21
    %p25 = pneg %p19
    %p26 = scmp.eq.s32.totalorder %s10, 7
    %p27 = por %p25, %p26
    %p28 = scmp.ne.s32.totalorder %s20, %s23
    %p29 = scmp.eq.s32.totalorder %s10, 0
    %p30 = por %p28, %p29
    %p31 = scmp.ne.s32.totalorder %s20, %s23
    %p32 = scmp.eq.s32.totalorder %s15, 7
    %p33 = por %p31, %p32
    %p34 = scmp.ne.s32.totalorder %s23, %s24
    %p35 = scmp.eq.s32.totalorder %s15, 0
    %p36 = por %p34, %p35
    %p37 = scmp.ne.s32.totalorder %s23, %s24
    %p38 = scmp.eq.s32.totalorder %s16, 7
    %p39 = por %p37, %p38
    %p41 = scmp.ne.s32.totalorder %s24, %s40
    %p42 = scmp.eq.s32.totalorder %s16, 0
    %p43 = por %p41, %p42
    %s45 = sadd.s32 %s44, 1
    %p48 = scmp.eq.s32.totalorder %s10, 7
    %p49 = scmp.ne.s32.totalorder %s44, %s46
    %p50 = scmp.eq.s32.totalorder %s10, 0
    %p51 = por %p49, %p50
    %p52 = scmp.ne.s32.totalorder %s44, %s46
    %p53 = scmp.eq.s32.totalorder %s15, 7
    %p54 = por %p52, %p53
    %p55 = scmp.ne.s32.totalorder %s46, %s47
    %p56 = scmp.eq.s32.totalorder %s15, 0
    %p57 = por %p55, %p56
    %p58 = scmp.ne.s32.totalorder %s46, %s47
    %p59 = scmp.eq.s32.totalorder %s16, 7
    %p60 = por %p58, %p59
    %p62 = scmp.ne.s32.totalorder %s47, %s61
    %p63 = scmp.eq.s32.totalorder %s16, 0
    %p64 = por %p62, %p63
    %s65 = ssub.s32 %s10, %s17
    %p66 = scmp.eq.s32.totalorder %s65, 0
    %s68 = sadd.s32 %s67, 1
    %s69 = scalar_select %p66, %s67, %s68
    %p72 = pneg %p66
    %p73 = scmp.eq.s32.totalorder %s10, 7
    %p74 = por %p72, %p73
    %p75 = scmp.ne.s32.totalorder %s67, %s70
    %p76 = scmp.eq.s32.totalorder %s10, 0
    %p77 = por %p75, %p76
    %p78 = scmp.ne.s32.totalorder %s67, %s70
    %p79 = scmp.eq.s32.totalorder %s15, 7
    %p80 = por %p78, %p79
    %p81 = scmp.ne.s32.totalorder %s70, %s71
    %p82 = scmp.eq.s32.totalorder %s15, 0
    %p83 = por %p81, %p82
    %p84 = scmp.ne.s32.totalorder %s70, %s71
    %p85 = scmp.eq.s32.totalorder %s16, 7
    %p86 = por %p84, %p85
    %p88 = scmp.ne.s32.totalorder %s71, %s87
    %p89 = scmp.eq.s32.totalorder %s16, 0
    %p90 = por %p88, %p89
    %s92 = sadd.s32 %s91, 1
    %p95 = scmp.eq.s32.totalorder %s10, 7
    %p96 = scmp.ne.s32.totalorder %s91, %s93
    %p97 = scmp.eq.s32.totalorder %s10, 0
    %p98 = por %p96, %p97
    %p99 = scmp.ne.s32.totalorder %s91, %s93
    %p100 = scmp.eq.s32.totalorder %s15, 7
    %p101 = por %p99, %p100
    %p102 = scmp.ne.s32.totalorder %s93, %s94
    %p103 = scmp.eq.s32.totalorder %s15, 0
    %p104 = por %p102, %p103
    %p105 = scmp.ne.s32.totalorder %s93, %s94
    %p106 = scmp.eq.s32.totalorder %s16, 7
    %p107 = por %p105, %p106
    %p109 = scmp.ne.s32.totalorder %s94, %s108
    %p110 = scmp.eq.s32.totalorder %s16, 0
    %p111 = por %p109, %p110
    %p112 = scmp.le.s32.totalorder 1, %s10
    %p113 = scmp.lt.s32.totalorder %s10, 9
    %p114 = pnand %p112, %p113
    %p115 = pneg %p114
    // Predicated region
    $region9: #{vqa_forward.12} parent=5 // pred_check
      _
    $region10: #{vqa_forward.12} parent=5 // pred_check_branch
      %117 = sbr.rel (%p114) target = $region12
    $region11: #{vqa_forward.12} parent=5 // pred_region
      %s118 = ssub.s32 %s10, 1
      // Predicated region
      $region13: #{vqa_forward.12} parent=11 // pred_check
        %p119 = pneg %p57
      $region14: #{vqa_forward.12} parent=11 // pred_check_branch
        %121 = sbr.rel (%p119) target = $region16
      $region15: #{vqa_forward.12} parent=11 // pred_region
        _
      $region16: #{vqa_forward.12} parent=11 // pred_fallthru
        _
    $region12: #{vqa_forward.12} parent=5 // pred_fallthru
      _
    %p122 = scmp.lt.s32.totalorder %s10, 8
    // Predicated region
    $region17: #{vqa_forward.12} parent=5 // pred_check
      %p123 = pneg %p122
    $region18: #{vqa_forward.12} parent=5 // pred_check_branch
      %125 = sbr.rel (%p123) target = $region20
    $region19: #{vqa_forward.12} parent=5 // pred_region
      // Predicated region
      $region21: #{vqa_forward.12} parent=19 // pred_check
        %p126 = pneg %p30
      $region22: #{vqa_forward.12} parent=19 // pred_check_branch
        %128 = sbr.rel (%p126) target = $region24
      $region23: #{vqa_forward.12} parent=19 // pred_region
        %p129 = scmp.lt.s32.totalorder %s10, 7
        %s130 = scalar_select %p129, %s10, 7
        %s131 = smul.addr %s130, 2
        %s132 = scalar_lea.vmem %s0, %s131
      $region24: #{vqa_forward.12} parent=19 // pred_fallthru
        _
    $region20: #{vqa_forward.12} parent=5 // pred_fallthru
      _
    %p133 = scmp.le.s32.totalorder 1, %s10
    %p134 = scmp.lt.s32.totalorder %s10, 9
    %p135 = pnand %p133, %p134
    %p136 = pneg %p135
    // Predicated region
    $region25: #{vqa_forward.12} parent=5 // pred_check
      _
    $region26: #{vqa_forward.12} parent=5 // pred_check_branch
      %138 = sbr.rel (%p135) target = $region28
    $region27: #{vqa_forward.12} parent=5 // pred_region
      %s139 = ssub.s32 %s10, 1
      %p140 = scmp.lt.s32.totalorder %s15, 7
      %s141 = scalar_select %p140, %s15, 7
      %s142 = smul.addr %s141, 2
      %s143 = scalar_lea.vmem %s0, %s142
      %p144 = pneg %p36
      %p145 = pneg %p33
      %p146 = pneg %p57
      %p147 = pneg %p54
      %p148 = pneg %p83
      %p149 = pneg %p80
      %p150 = scmp.lt.s32.totalorder %s15, 7
      %s151 = scalar_select %p150, %s15, 7
      %s152 = smul.addr %s151, 2
      %s153 = scalar_lea.vmem %s2, %s152
      %p154 = pneg %p104
      %p155 = pneg %p101
      %p156 = scmp.lt.s32.totalorder %s15, 7
      %s157 = scalar_select %p156, %s15, 7
      %s158 = smul.addr %s157, 2
      %s159 = scalar_lea.vmem %s0, %s158
      %p160 = scmp.lt.s32.totalorder %s15, 7
      %s161 = scalar_select %p160, %s15, 7
      %s162 = smul.addr %s161, 2
      %s163 = scalar_lea.vmem %s2, %s162
      %p165 = scmp.eq.s32.totalorder %s15, 0
      // Predicated region
      $region29: #{vqa_forward.12} parent=27 // pred_check
        %p166 = pneg %p165
      $region30: #{vqa_forward.12} parent=27 // pred_check_branch
        %168 = sbr.rel (%p166) target = $region32
      $region31: #{vqa_forward.12} parent=27 // pred_region
        %vm169 = vcmask 254976
        %170 = vst.msk [vmem:[#allocation2] sm:$0x3] %vm169, 0.0
        %171 = vst.msk [vmem:[#allocation3] sm:$0x3] %vm169, 0.0
      $region32: #{vqa_forward.12} parent=27 // pred_fallthru
        _
      %v172 = vld [vmem:[%s159] sm:$0x3]
      %v173 = vld [vmem:[#allocation2] sm:$0x3]
      %v174 = vpack.c.bf16 %v173, %v173
      %v175 = vld [vmem:[%s1] sm:$0xf]
      %v176 = vld [vmem:[%s1 + $0x4] sm:$0xf]
      %v177 = vld [vmem:[%s1 + $0x8] sm:$0xf]
      %v178 = vld [vmem:[%s1 + $0xc] sm:$0xf]
      %v183 = vunpack.c.l.b16 %v175
      %v184 = vunpack.c.l.b16 %v176
      %v185 = vunpack.c.l.b16 %v177
      %v186 = vunpack.c.l.b16 %v178
      %v187 = vpack.c.b16 %v184, %v183
      %v188 = vpack.c.b16 %v186, %v185
      %vm191 = vcmask 261120
      %v193 = vsel %vm191, %v174, 0
      %195 = vmatpush.bf16.msra.mxu0 0
      %196 = vmatpush.bf16.msra.mxu0 0
      %197 = vmatpush.bf16.msra.mxu0 0
      %198 = vmatpush.bf16.msra.mxu0 0
      %199 = vmatpush.bf16.msra.mxu0 0
      %200 = vmatpush.bf16.msra.mxu0 0
      %201 = vmatpush.bf16.msra.mxu0 %v188
      %202 = vmatpush.bf16.msra.mxu0 %v187
      %203 = vmatmul.bf16.gmra.mxu0 %v193
      %v204 = vpop.f32.mrf.mxu0
      %v205 = vadd.f32 0.0, %v204
      %v206 = vpop.f32.mrf.mxu0
      %207 = vdwg.mxu0
      %v208 = vadd.f32 %v172, %v205
      %v209 = vxor.u32 %v208, 2147483648
      %v210 = vmul.f32 %v209, 1.442695
      %v211 = vpow.pop %v210
      %v212 = vadd.f32 %v211, 1.0
      %v213 = vrcp.pop %v212
      %v214 = vmul.f32 %v212, %v213
      %v215 = vsub.f32 1.0, %v214
      %v216 = vmul.f32 %v213, %v215
      %v217 = vadd.f32 %v213, %v216
      %vm218 = vweird.f32 %v212
      %vm219 = vweird.f32 %v213
      %vm220 = vmor %vm218, %vm219
      %v221 = vsel %vm220, %v213, %v217
      %v222 = vand.u32 2147483647, %v212
      %vm223 = vcmp.eq.f32.partialorder %v222, 8.507059e+37
      %v224 = vand.u32 %v212, 2147483648
      %v225 = vor.u32 1.1754944e-38, %v224
      %v226 = vsel %vm223, %v225, %v221
      %v227 = vmul.f32 1.0, %v226
      %v228 = vtanh.pop %v208
      %v229 = vld [vmem:[#allocation3] sm:$0x3]
      %231 = vrot.lane.b32.xlu0 %v229, 32
      %v232 = vpop.permute.xlu0 %231
      %v234 = vmul.f32 %v227, %v232
      %236 = vrot.lane.b32.xlu0 %v228, 64
      %v237 = vpop.permute.xlu0 %236
      %v239 = vmul.f32 %v227, %v237
      %241 = vrot.lane.b32.xlu0 %v239, 32
      %v242 = vpop.permute.xlu0 %241
      %v244 = vadd.f32 %v234, %v242
      %v245 = vtanh.pop %v244
      %247 = vrot.lane.b32.xlu0 %v245, 64
      %v248 = vpop.permute.xlu0 %247
      %v250 = vmul.f32 %v227, %v248
      %252 = vrot.lane.b32.xlu0 %v250, 32
      %v253 = vpop.permute.xlu0 %252
      %vm255 = vcmask 254976
      %256 = vst.msk [vmem:[#allocation2] sm:$0x3] %vm255, %v253
      %258 = vrot.lane.b32.xlu0 %v244, 96
      %v259 = vpop.permute.xlu0 %258
      %261 = vst.msk [vmem:[#allocation3] sm:$0x3] %vm255, %v259
      %262 = vst.msk [vmem:[%s163] sm:$0x3] %vm255, %v253
      %263 = vst.msk [vmem:[%s3] sm:$0x3] %vm255, %v259
      %p264 = scmp.lt.s32.totalorder %s15, 7
      %s265 = scalar_select %p264, %s15, 7
      %s266 = smul.addr %s265, 2
      %s267 = scalar_lea.vmem %s2, %s266
      // Predicated region
      $region33: #{vqa_forward.12} parent=27 // pred_check
        %p268 = pneg %p80
      $region34: #{vqa_forward.12} parent=27 // pred_check_branch
        %270 = sbr.rel (%p268) target = $region36
      $region35: #{vqa_forward.12} parent=27 // pred_region
        _
      $region36: #{vqa_forward.12} parent=27 // pred_fallthru
        _
      // Predicated region
      $region37: #{vqa_forward.12} parent=27 // pred_check
        %p271 = pneg %p101
      $region38: #{vqa_forward.12} parent=27 // pred_check_branch
        %273 = sbr.rel (%p271) target = $region40
      $region39: #{vqa_forward.12} parent=27 // pred_region
        _
      $region40: #{vqa_forward.12} parent=27 // pred_fallthru
        _
      // Predicated region
      $region41: #{vqa_forward.12} parent=27 // pred_check
        %p274 = pneg %p101
      $region42: #{vqa_forward.12} parent=27 // pred_check_branch
        %276 = sbr.rel (%p274) target = $region44
      $region43: #{vqa_forward.12} parent=27 // pred_region
        _
      $region44: #{vqa_forward.12} parent=27 // pred_fallthru
        _
    $region28: #{vqa_forward.12} parent=5 // pred_fallthru
      _
    %p277 = scmp.le.s32.totalorder 2, %s10
    // Predicated region
    $region45: #{vqa_forward.12} parent=5 // pred_check
      %p278 = pneg %p277
    $region46: #{vqa_forward.12} parent=5 // pred_check_branch
      %280 = sbr.rel (%p278) target = $region48
    $region47: #{vqa_forward.12} parent=5 // pred_region
      %s281 = ssub.s32 %s10, 2
      // Predicated region
      $region49: #{vqa_forward.12} parent=47 // pred_check
        %p282 = pneg %p86
      $region50: #{vqa_forward.12} parent=47 // pred_check_branch
        %284 = sbr.rel (%p282) target = $region52
      $region51: #{vqa_forward.12} parent=47 // pred_region
        %p285 = scmp.lt.s32.totalorder %s16, 7
        %s286 = scalar_select %p285, %s16, 7
        %s287 = smul.addr %s286, 2
        %s288 = scalar_lea.vmem %s2, %s287
      $region52: #{vqa_forward.12} parent=47 // pred_fallthru
        _
    $region48: #{vqa_forward.12} parent=5 // pred_fallthru
      _
  $region6: #{vqa_forward.12} parent=0 // loop_footer
    %s14 = sadd.s32 1, %s10
  $region7: #{vqa_forward.12} parent=0 // loop_footer_branch
    %9 = sbr.rel target = $region3
  $region8: #{vqa_forward.12} parent=0 // loop_exit
    _

// kernel: vqa_forward.15
$region0: #{vqa_forward.15}
  #allocation0 [shape = 'u32[]', space=smem, size = 0x4, offset = 0x4, fixed_abs, tag = 'smem constant byte address 0x4 - core index']
  #allocation1 [shape = 'u32[72,128]{1,0:T(1,128)}', space=vmem, size = 0x9000, scoped, tag = 'internal scratch']
  %s0 = inlined_call_operand.vmem [shape: f32[2,128], index: 0, kind: input, shape index: {}]
  %s1 = inlined_call_operand.vmem [shape: f32[2,128], index: 1, kind: input, shape index: {}]
  %s2 = inlined_call_operand.vmem [shape: bf16[128,128], index: 2, kind: input, shape index: {}]
  %s3 = inlined_call_operand.vmem [shape: f32[1,128], index: 3, kind: input, shape index: {}]
  %s4 = inlined_call_operand.vmem [shape: bf16[128,128], index: 4, kind: input, shape index: {}]
  %s5 = inlined_call_operand.vmem [shape: f32[1,128], index: 5, kind: input, shape index: {}]
  %s6 = inlined_call_operand.hbm [shape: f32[2,128], index: 6, kind: output, shape index: {}]
  %s7 = sld [smem:[#allocation0]]
  $region34: #{vqa_forward.15} parent=0
    _
  %s9 = ssub.s32 1, %s7
  %s10 = scalar_select 0, %s9, %s7
  $region1: #{vqa_forward.15} parent=0
    #allocation2 [shape = 'u8[1024]{0}', space=vmem, size = 0x400, scoped, tag = 'output window, operand 0, single buffered']
    #allocation3 [shape = 's32[1]{0}', space=sflag, size = 0x4, scoped, tag = 'scoped memory for vqa_forward.15']
    %11 = vsyncpa [#allocation3], 0
    // Predicated region
    $region2: #{vqa_forward.15} parent=1 // pred_check
      _
    $region3: #{vqa_forward.15} parent=1 // pred_check_branch
      %13 = sbr.rel (0) target = $region5
    $region4: #{vqa_forward.15} parent=1 // pred_region
      _
    $region5: #{vqa_forward.15} parent=1 // pred_fallthru
      _
    // Predicated region
    $region6: #{vqa_forward.15} parent=1 // pred_check
      _
    $region7: #{vqa_forward.15} parent=1 // pred_check_branch
      %15 = sbr.rel (0) target = $region9
    $region8: #{vqa_forward.15} parent=1 // pred_region
      _
    $region9: #{vqa_forward.15} parent=1 // pred_fallthru
      _
    // Predicated region
    $region10: #{vqa_forward.15} parent=1 // pred_check
      _
    $region11: #{vqa_forward.15} parent=1 // pred_check_branch
      %17 = sbr.rel (0) target = $region13
    $region12: #{vqa_forward.15} parent=1 // pred_region
      _
    $region13: #{vqa_forward.15} parent=1 // pred_fallthru
      _
    // Predicated region
    $region14: #{vqa_forward.15} parent=1 // pred_check
      _
    $region15: #{vqa_forward.15} parent=1 // pred_check_branch
      %19 = sbr.rel (0) target = $region17
    $region16: #{vqa_forward.15} parent=1 // pred_region
      _
    $region17: #{vqa_forward.15} parent=1 // pred_fallthru
      _
    // Predicated region
    $region18: #{vqa_forward.15} parent=1 // pred_check
      _
    $region19: #{vqa_forward.15} parent=1 // pred_check_branch
      %21 = sbr.rel (0) target = $region21
    $region20: #{vqa_forward.15} parent=1 // pred_region
      _
    $region21: #{vqa_forward.15} parent=1 // pred_fallthru
      _
    // Predicated region
    $region22: #{vqa_forward.15} parent=1 // pred_check
      _
    $region23: #{vqa_forward.15} parent=1 // pred_check_branch
      %23 = sbr.rel (0) target = $region25
    $region24: #{vqa_forward.15} parent=1 // pred_region
      _
    $region25: #{vqa_forward.15} parent=1 // pred_fallthru
      _
    %v24 = vld [vmem:[%s0] sm:$0x3]
    %v25 = vtanh.pop %v24
    %v26 = vpack.c.bf16 %v25, %v25
    %v27 = vld [vmem:[%s2] sm:$0xf]
    %v28 = vld [vmem:[%s2 + $0x4] sm:$0xf]
    %v29 = vld [vmem:[%s2 + $0x8] sm:$0xf]
    %v30 = vld [vmem:[%s2 + $0xc] sm:$0xf]
    %v31 = vld [vmem:[%s2 + $0x10] sm:$0xf]
    %v32 = vld [vmem:[%s2 + $0x14] sm:$0xf]
    %v33 = vld [vmem:[%s2 + $0x18] sm:$0xf]
    %v34 = vld [vmem:[%s2 + $0x1c] sm:$0xf]
    %v35 = vld [vmem:[%s2 + $0x20] sm:$0xf]
    %v36 = vld [vmem:[%s2 + $0x24] sm:$0xf]
    %v37 = vld [vmem:[%s2 + $0x28] sm:$0xf]
    %v38 = vld [vmem:[%s2 + $0x2c] sm:$0xf]
    %v39 = vld [vmem:[%s2 + $0x30] sm:$0xf]
    %v40 = vld [vmem:[%s2 + $0x34] sm:$0xf]
    %v41 = vld [vmem:[%s2 + $0x38] sm:$0xf]
    %v42 = vld [vmem:[%s2 + $0x3c] sm:$0xf]
    %v43 = vld [vmem:[%s3] sm:$0x1]
    %v45 = vperm.slane %v43, 0
    %v63 = vunpack.c.l.b16 %v27
    %v64 = vunpack.c.l.b16 %v28
    %v65 = vunpack.c.l.b16 %v29
    %v66 = vunpack.c.l.b16 %v30
    %v67 = vunpack.c.l.b16 %v31
    %v68 = vunpack.c.l.b16 %v32
    %v69 = vunpack.c.l.b16 %v33
    %v70 = vunpack.c.l.b16 %v34
    %v71 = vunpack.c.l.b16 %v35
    %v72 = vunpack.c.l.b16 %v36
    %v73 = vunpack.c.l.b16 %v37
    %v74 = vunpack.c.l.b16 %v38
    %v75 = vunpack.c.l.b16 %v39
    %v76 = vunpack.c.l.b16 %v40
    %v77 = vunpack.c.l.b16 %v41
    %v78 = vunpack.c.l.b16 %v42
    %v79 = vpack.c.b16 %v64, %v63
    %v80 = vpack.c.b16 %v66, %v65
    %v81 = vpack.c.b16 %v68, %v67
    %v82 = vpack.c.b16 %v70, %v69
    %v83 = vpack.c.b16 %v72, %v71
    %v84 = vpack.c.b16 %v74, %v73
    %v85 = vpack.c.b16 %v76, %v75
    %v86 = vpack.c.b16 %v78, %v77
    %95 = vmatpush.bf16.msra.mxu0 %v86
    %96 = vmatpush.bf16.msra.mxu0 %v85
    %97 = vmatpush.bf16.msra.mxu0 %v84
    %98 = vmatpush.bf16.msra.mxu0 %v83
    %99 = vmatpush.bf16.msra.mxu0 %v82
    %100 = vmatpush.bf16.msra.mxu0 %v81
    %101 = vmatpush.bf16.msra.mxu0 %v80
    %102 = vmatpush.bf16.msra.mxu0 %v79
    %103 = vmatmul.bf16.gmra.mxu0 %v26
    %v104 = vpop.f32.mrf.mxu0
    %v105 = vadd.f32 %v45, %v104
    %v106 = vpop.f32.mrf.mxu0
    %107 = vdwg.mxu0
    %v108 = vld [vmem:[%s1] sm:$0x3]
    %v109 = vmul.f32 %v108, %v105
    %v110 = vtanh.pop %v109
    %v111 = vpack.c.bf16 %v110, %v110
    %v112 = vld [vmem:[%s4] sm:$0xf]
    %v113 = vld [vmem:[%s4 + $0x4] sm:$0xf]
    %v114 = vld [vmem:[%s4 + $0x8] sm:$0xf]
    %v115 = vld [vmem:[%s4 + $0xc] sm:$0xf]
    %v116 = vld [vmem:[%s4 + $0x10] sm:$0xf]
    %v117 = vld [vmem:[%s4 + $0x14] sm:$0xf]
    %v118 = vld [vmem:[%s4 + $0x18] sm:$0xf]
    %v119 = vld [vmem:[%s4 + $0x1c] sm:$0xf]
    %v120 = vld [vmem:[%s4 + $0x20] sm:$0xf]
    %v121 = vld [vmem:[%s4 + $0x24] sm:$0xf]
    %v122 = vld [vmem:[%s4 + $0x28] sm:$0xf]
    %v123 = vld [vmem:[%s4 + $0x2c] sm:$0xf]
    %v124 = vld [vmem:[%s4 + $0x30] sm:$0xf]
    %v125 = vld [vmem:[%s4 + $0x34] sm:$0xf]
    %v126 = vld [vmem:[%s4 + $0x38] sm:$0xf]
    %v127 = vld [vmem:[%s4 + $0x3c] sm:$0xf]
    %v128 = vld [vmem:[%s5] sm:$0x1]
    %v130 = vperm.slane %v128, 0
    %v148 = vunpack.c.l.b16 %v112
    %v149 = vunpack.c.l.b16 %v113
    %v150 = vunpack.c.l.b16 %v114
    %v151 = vunpack.c.l.b16 %v115
    %v152 = vunpack.c.l.b16 %v116
    %v153 = vunpack.c.l.b16 %v117
    %v154 = vunpack.c.l.b16 %v118
    %v155 = vunpack.c.l.b16 %v119
    %v156 = vunpack.c.l.b16 %v120
    %v157 = vunpack.c.l.b16 %v121
    %v158 = vunpack.c.l.b16 %v122
    %v159 = vunpack.c.l.b16 %v123
    %v160 = vunpack.c.l.b16 %v124
    %v161 = vunpack.c.l.b16 %v125
    %v162 = vunpack.c.l.b16 %v126
    %v163 = vunpack.c.l.b16 %v127
    %v164 = vpack.c.b16 %v149, %v148
    %v165 = vpack.c.b16 %v151, %v150
    %v166 = vpack.c.b16 %v153, %v152
    %v167 = vpack.c.b16 %v155, %v154
    %v168 = vpack.c.b16 %v157, %v156
    %v169 = vpack.c.b16 %v159, %v158
    %v170 = vpack.c.b16 %v161, %v160
    %v171 = vpack.c.b16 %v163, %v162
    %180 = vmatpush.bf16.msra.mxu0 %v171
    %181 = vmatpush.bf16.msra.mxu0 %v170
    %182 = vmatpush.bf16.msra.mxu0 %v169
    %183 = vmatpush.bf16.msra.mxu0 %v168
    %184 = vmatpush.bf16.msra.mxu0 %v167
    %185 = vmatpush.bf16.msra.mxu0 %v166
    %186 = vmatpush.bf16.msra.mxu0 %v165
    %187 = vmatpush.bf16.msra.mxu0 %v164
    %188 = vmatmul.bf16.gmra.mxu0 %v111
    %v189 = vpop.f32.mrf.mxu0
    %v190 = vadd.f32 %v130, %v189
    %v191 = vpop.f32.mrf.mxu0
    %192 = vdwg.mxu0
    %v193 = vtanh.pop %v190
    %v194 = vxor.u32 %v193, 2147483648
    %v195 = vmul.f32 %v194, 1.442695
    %v196 = vpow.pop %v195
    %v197 = vadd.f32 %v196, 1.0
    %v198 = vrcp.pop %v197
    %v199 = vmul.f32 %v197, %v198
    %v200 = vsub.f32 1.0, %v199
    %v201 = vmul.f32 %v198, %v200
    %v202 = vadd.f32 %v198, %v201
    %vm203 = vweird.f32 %v197
    %vm204 = vweird.f32 %v198
    %vm205 = vmor %vm203, %vm204
    %v206 = vsel %vm205, %v198, %v202
    %v207 = vand.u32 2147483647, %v197
    %vm208 = vcmp.eq.f32.partialorder %v207, 8.507059e+37
    %v209 = vand.u32 %v197, 2147483648
    %v210 = vor.u32 1.1754944e-38, %v209
    %v211 = vsel %vm208, %v210, %v206
    %v212 = vmul.f32 1.0, %v211
    %213 = vst [vmem:[#allocation2] sm:$0x3] %v212
    // Predicated region
    $region26: #{vqa_forward.15} parent=1 // pred_check
      _
    $region27: #{vqa_forward.15} parent=1 // pred_check_branch
      %215 = sbr.rel (0) target = $region29
    $region28: #{vqa_forward.15} parent=1 // pred_region
      %217 = vsyncadd [#allocation3], 0
      %s219 = sshll.u32 [#allocation2], 4
      %s220 = int_to_ptr.vmem [resolvable:$true] %s219
      %s221 = sshll.u32 %s6, 4
      %s222 = int_to_ptr.hbm [resolvable:$true] %s221
      %224 = dma.vmem_to_hbm [thread:$0]  %s220, 32, %s222, [#allocation3]
    $region29: #{vqa_forward.15} parent=1 // pred_fallthru
      _
    // Predicated region
    $region30: #{vqa_forward.15} parent=1 // pred_check
      _
    $region31: #{vqa_forward.15} parent=1 // pred_check_branch
      %226 = sbr.rel (0) target = $region33
    $region32: #{vqa_forward.15} parent=1 // pred_region
      %228 = dma.done [#allocation3], 32
    $region33: #{vqa_forward.15} parent=1 // pred_fallthru
      _
    %229 = vsyncpa [#allocation3], 1

</llo_original>
